<compile_context>
chip_gen: v5e
topology: v5e:2x2
jax: 0.10.0
libtpu: 0.0.40
codegen_flags: <defaults>
</compile_context>

<pallas_src>
import jax
import jax.numpy as jnp
from jax.experimental import pallas as pl
from jax.experimental.pallas import tpu as pltpu

# ----------------------------- "config" ------------------------------------
N_EMBD = 32          # config.n_embd / d_model
N_HEAD = 4
D_HEAD = N_EMBD // N_HEAD
D_FF = 64
N_LAYER = 2
VOCAB = 64
NUM_BUCKETS = 8
MAX_DISTANCE = 16

NUM_NOTES = 128
NUM_DURATIONS = 12
NUM_GAPS = 7
HEAD_TOTAL = NUM_NOTES + NUM_DURATIONS + NUM_GAPS    # 147
HEAD_PAD = 256                                       # lane-dense head output
LANE = 128                                           # packed slab lane width

B = 2
S = 8
EPS = 1e-6

BH = B * N_HEAD            # 8   flattened (batch, head) blocks
BHS = BH * S               # 64  flattened attention rows/cols


# ----------------------------- Pallas kernel --------------------------------
def music_t5_kernel(
    x_ref,       # (B*S, D)          embedded inputs, batch folded into rows
    bias_ref,    # (BHS, BHS)        rel-pos bias + mask bias + block-diag mask
    layers_ref,  # (L, 160, 128)     [wqkv(32) | wo(32) | wi(32) | wff(64)] rows
    norms_ref,   # (2L+1, 128)       [ln1(L) | ln2(L) | lnf(1)] rows, D live lanes
    head_ref,    # (D+1, 256)        fused head weight rows + bias row
    out_ref,     # (B, 256)          fused head logits
):
    D, F, H, dh = N_EMBD, D_FF, N_HEAD, D_HEAD

    def rms_norm(x, w):
        # T5 LayerNorm: no mean subtraction, no bias.
        var = jnp.mean(x * x, axis=-1, keepdims=True)
        return x * jax.lax.rsqrt(var + EPS) * w

    def to_heads(z):
        # (B*S, D) rows=(b,s), lanes=(h,dh)  ->  (B*H*S, dh) rows=(b,h,s)
        blocks = []
        for b in range(B):
            zb = z[b * S:(b + 1) * S, :]                       # (S, D)
            for hh in range(H):
                blocks.append(zb[:, hh * dh:(hh + 1) * dh])    # (S, dh)
        return jnp.concatenate(blocks, axis=0)                  # (B*H*S, dh)

    def from_heads(z):
        # (B*H*S, dh) rows=(b,h,s)  ->  (B*S, D) rows=(b,s), lanes=(h,dh)
        rows = []
        for b in range(B):
            hs = [z[(b * H + hh) * S:(b * H + hh + 1) * S, :] for hh in range(H)]
            rows.append(jnp.concatenate(hs, axis=1))            # (S, D)
        return jnp.concatenate(rows, axis=0)                     # (B*S, D)

    h = x_ref[...]            # (B*S, D)
    bias = bias_ref[...]      # (BHS, BHS)

    for l in range(N_LAYER):
        ln1 = norms_ref[l:l + 1, 0:D]                            # (1, D)
        ln2 = norms_ref[N_LAYER + l:N_LAYER + l + 1, 0:D]        # (1, D)
        wqkv = layers_ref[l, 0:D, :]                             # (D, 128)
        wo = layers_ref[l, D:2 * D, 0:D]                         # (D, D)
        wi = layers_ref[l, 2 * D:3 * D, 0:F]                     # (D, F)
        wff = layers_ref[l, 3 * D:3 * D + F, 0:D]                # (F, D)

        # ---------------- self-attention sub-block ----------------
        xn = rms_norm(h, ln1)
        qkv = jnp.dot(xn, wqkv, preferred_element_type=jnp.float32)   # (B*S,128)
        q = to_heads(qkv[:, 0:D])              # (BHS, dh)
        k = to_heads(qkv[:, D:2 * D])          # (BHS, dh)
        v = to_heads(qkv[:, 2 * D:3 * D])      # (BHS, dh)

        # One matmul for all (batch, head) blocks; cross-block entries are
        # masked to ~-inf by the precomputed bias. T5: no 1/sqrt(d) scaling.
        scores = jax.lax.dot_general(
            q, k, (((1,), (1,)), ((), ())),
            preferred_element_type=jnp.float32) + bias                 # (64, 64)
        scores = scores - jnp.max(scores, axis=-1, keepdims=True)
        p = jnp.exp(scores)
        p = p * pl.reciprocal(jnp.sum(p, axis=-1, keepdims=True), approx=True)

        ctx = from_heads(jnp.dot(p, v, preferred_element_type=jnp.float32))
        h = h + jnp.dot(ctx, wo, preferred_element_type=jnp.float32)

        # ---------------- feed-forward sub-block ----------------
        xn = rms_norm(h, ln2)
        ff = jnp.maximum(
            jnp.dot(xn, wi, preferred_element_type=jnp.float32), 0.0)
        h = h + jnp.dot(ff, wff, preferred_element_type=jnp.float32)

    # last sequence position per batch element (rows b*S + S-1), normed once
    h_last = jnp.concatenate(
        [h[b * S + S - 1: b * S + S, :] for b in range(B)], axis=0)     # (B, D)
    lnf = norms_ref[2 * N_LAYER:2 * N_LAYER + 1, 0:D]
    h_last = rms_norm(h_last, lnf)

    logits = (jnp.dot(h_last, head_ref[0:D, :],
                      preferred_element_type=jnp.float32)
              + head_ref[D:D + 1, :])                                    # (B, 256)
    out_ref[...] = logits


# ----------------------------- parameter prep --------------------------------
def _relative_position_bucket(relative_position, num_buckets, max_distance):
    # Bidirectional T5 bucketing.
    half = num_buckets // 2
    rel_buckets = (relative_position > 0).astype(jnp.int32) * half
    n = jnp.abs(relative_position)
    max_exact = half // 2
    is_small = n < max_exact
    n_safe = jnp.maximum(n, 1).astype(jnp.float32)
    val_if_large = max_exact + (
        jnp.log(n_safe / max_exact) / jnp.log(max_distance / max_exact)
        * (half - max_exact)
    ).astype(jnp.int32)
    val_if_large = jnp.minimum(val_if_large, half - 1)
    rel_buckets = rel_buckets + jnp.where(is_small, n, val_if_large)
    return rel_buckets


def compute_position_bias(rel_bias_table, seq_len):
    ctx = jnp.arange(seq_len)[:, None]
    mem = jnp.arange(seq_len)[None, :]
    buckets = _relative_position_bucket(mem - ctx, NUM_BUCKETS, MAX_DISTANCE)
    bias = rel_bias_table[buckets]              # (S, S, H)
    return jnp.transpose(bias, (2, 0, 1))       # (H, S, S)


def prepare_params(params):
    """One-time packing of parameters into the kernel's fused slabs."""
    D, F, L, H = N_EMBD, D_FF, N_LAYER, N_HEAD

    # Per-layer weight slab: rows [wqkv(32) | wo(32) | wi(32) | wff(64)], 128 lanes.
    wqkv = jnp.concatenate([params["wq"], params["wk"], params["wv"]], axis=2)
    wqkv = jnp.pad(wqkv, ((0, 0), (0, 0), (0, LANE - 3 * D)))      # (L, 32, 128)
    wo = jnp.pad(params["wo"], ((0, 0), (0, 0), (0, LANE - D)))    # (L, 32, 128)
    wi = jnp.pad(params["wi"], ((0, 0), (0, 0), (0, LANE - F)))    # (L, 32, 128)
    wff = jnp.pad(params["wff"], ((0, 0), (0, 0), (0, LANE - D)))  # (L, 64, 128)
    layers = jnp.concatenate([wqkv, wo, wi, wff], axis=1)          # (L, 160, 128)

    # Norm-weight slab: rows [ln1(L) | ln2(L) | lnf(1)], first D lanes live.
    norms = jnp.zeros((2 * L + 1, LANE), jnp.float32)
    norms = norms.at[0:L, :D].set(params["ln1"])
    norms = norms.at[L:2 * L, :D].set(params["ln2"])
    norms = norms.at[2 * L, :D].set(params["lnf"][0])

    # Fused classification heads (note|duration|gap), padded to 256 lanes,
    # with the bias appended as the last row.
    whead = jnp.concatenate([params["wn"], params["wd"], params["wg"]], axis=1)
    bhead = jnp.concatenate([params["bn"], params["bd"], params["bg"]], axis=1)
    head = jnp.concatenate([whead, bhead], axis=0)                 # (D+1, 147)
    head = jnp.pad(head, ((0, 0), (0, HEAD_PAD - HEAD_TOTAL)))     # (D+1, 256)

    # Flattened-attention bias table: (BHS, BHS) with the relative-position
    # bias on the (b, h)-diagonal blocks and -2e9 on cross-(b,h) blocks.
    pos_bias = compute_position_bias(params["rel_bias"], S)        # (H, S, S)
    diag = jnp.broadcast_to(pos_bias[None], (B, N_HEAD, S, S)).reshape(BH, S, S)
    eye = jnp.eye(BH, dtype=jnp.float32)
    bias_base = (eye[:, None, :, None] * diag[:, :, None, :]
                 + (1.0 - eye)[:, None, :, None] * jnp.float32(-2e9))
    bias_base = bias_base.reshape(BHS, BHS)

    return {"embed": params["embed"], "layers": layers, "norms": norms,
            "head": head, "bias_base": bias_base}


# ----------------------------- JAX glue --------------------------------------
@jax.jit
def music_t5_forward(prepped, input_ids, attention_mask):
    x = prepped["embed"][input_ids].astype(jnp.float32)            # (B, S, D)
    x = x.reshape(B * S, N_EMBD)

    # Per-key attention-mask bias, broadcast to the (b, h, k) column ordering.
    col_mask = (1.0 - attention_mask.astype(jnp.float32)) * jnp.float32(-1e9)
    col_bias = jnp.broadcast_to(col_mask[:, None, :],
                                (B, N_HEAD, S)).reshape(1, BHS)
    bias = prepped["bias_base"] + col_bias                          # (BHS, BHS)

    vmem_spec = pl.BlockSpec(memory_space=pltpu.MemorySpace.VMEM)
    logits = pl.pallas_call(
        music_t5_kernel,
        out_shape=jax.ShapeDtypeStruct((B, HEAD_PAD), jnp.float32),
        in_specs=[vmem_spec] * 5,
        out_specs=vmem_spec,
    )(x, bias, prepped["layers"], prepped["norms"], prepped["head"])

    note_logits = logits[:, :NUM_NOTES]
    duration_logits = logits[:, NUM_NOTES:NUM_NOTES + NUM_DURATIONS]
    gap_logits = logits[:, NUM_NOTES + NUM_DURATIONS:HEAD_TOTAL]
    return note_logits, duration_logits, gap_logits


def init_params(key):
    ks = jax.random.split(key, 16)
    sc = 0.02

    def nrm(k, shape):
        return (sc * jax.random.normal(k, shape)).astype(jnp.float32)

    D, F, L, H = N_EMBD, D_FF, N_LAYER, N_HEAD
    return {
        "embed": nrm(ks[0], (VOCAB, D)),
        "rel_bias": nrm(ks[1], (NUM_BUCKETS, H)),
        "wq": nrm(ks[2], (L, D, D)),
        "wk": nrm(ks[3], (L, D, D)),
        "wv": nrm(ks[4], (L, D, D)),
        "wo": nrm(ks[5], (L, D, D)),
        "wi": nrm(ks[6], (L, D, F)),
        "wff": nrm(ks[7], (L, F, D)),
        "ln1": jnp.ones((L, D), jnp.float32),
        "ln2": jnp.ones((L, D), jnp.float32),
        "lnf": jnp.ones((1, D), jnp.float32),
        "wn": nrm(ks[8], (D, NUM_NOTES)),
        "bn": jnp.zeros((1, NUM_NOTES), jnp.float32),
        "wd": nrm(ks[9], (D, NUM_DURATIONS)),
        "bd": jnp.zeros((1, NUM_DURATIONS), jnp.float32),
        "wg": nrm(ks[10], (D, NUM_GAPS)),
        "bg": jnp.zeros((1, NUM_GAPS), jnp.float32),
    }


if __name__ == "__main__":
    key = jax.random.PRNGKey(0)
    pkey, ikey = jax.random.split(key)
    params = init_params(pkey)
    prepped = prepare_params(params)     # one-time packing, outside per-call jit

    input_ids = jax.random.randint(ikey, (B, S), 0, VOCAB, dtype=jnp.int32)
    attention_mask = jnp.ones((B, S), jnp.float32)

    note_logits, duration_logits, gap_logits = music_t5_forward(
        prepped, input_ids, attention_mask)
    jax.block_until_ready((note_logits, duration_logits, gap_logits))

    assert note_logits.shape == (B, NUM_NOTES)
    assert duration_logits.shape == (B, NUM_DURATIONS)
    assert gap_logits.shape == (B, NUM_GAPS)
    assert bool(jnp.all(jnp.isfinite(note_logits)))
    assert bool(jnp.all(jnp.isfinite(duration_logits)))
    assert bool(jnp.all(jnp.isfinite(gap_logits)))
    print("KERNEL_OK")
</pallas_src>

<mosaic_0001>
module attributes {stable_mosaic.version = 11 : i64} {
  func.func @music_t5_kernel(%arg0: memref<16x32xf32, #tpu.memory_space<vmem>>, %arg1: memref<64x64xf32, #tpu.memory_space<vmem>>, %arg2: memref<2x160x128xf32, #tpu.memory_space<vmem>>, %arg3: memref<5x128xf32, #tpu.memory_space<vmem>>, %arg4: memref<33x256xf32, #tpu.memory_space<vmem>>, %arg5: memref<2x256xf32, #tpu.memory_space<vmem>>) attributes {dimension_semantics = [], scalar_prefetch = 0 : i64, scratch_operands = 0 : i64, tpu.core_type = #tpu.core_type<tc>} {
    %c0 = arith.constant 0 : index
    %c0_0 = arith.constant 0 : index
    %0 = vector.load %arg0[%c0, %c0_0] : memref<16x32xf32, #tpu.memory_space<vmem>>, vector<16x32xf32>
    %c0_1 = arith.constant 0 : index
    %c0_2 = arith.constant 0 : index
    %1 = vector.load %arg1[%c0_1, %c0_2] : memref<64x64xf32, #tpu.memory_space<vmem>>, vector<64x64xf32>
    %c0_3 = arith.constant 0 : index
    %c0_4 = arith.constant 0 : index
    %2 = vector.load %arg3[%c0_3, %c0_4] : memref<5x128xf32, #tpu.memory_space<vmem>>, vector<1x32xf32>
    %c2 = arith.constant 2 : index
    %c0_5 = arith.constant 0 : index
    %3 = vector.load %arg3[%c2, %c0_5] : memref<5x128xf32, #tpu.memory_space<vmem>>, vector<1x32xf32>
    %c0_6 = arith.constant 0 : index
    %c0_7 = arith.constant 0 : index
    %c0_8 = arith.constant 0 : index
    %4 = vector.load %arg2[%c0_6, %c0_7, %c0_8] : memref<2x160x128xf32, #tpu.memory_space<vmem>>, vector<1x32x128xf32>
    %5 = vector.shape_cast %4 : vector<1x32x128xf32> to vector<32x128xf32>
    %c0_9 = arith.constant 0 : index
    %c32 = arith.constant 32 : index
    %c0_10 = arith.constant 0 : index
    %6 = vector.load %arg2[%c0_9, %c32, %c0_10] : memref<2x160x128xf32, #tpu.memory_space<vmem>>, vector<1x32x32xf32>
    %7 = vector.shape_cast %6 : vector<1x32x32xf32> to vector<32x32xf32>
    %c0_11 = arith.constant 0 : index
    %c64 = arith.constant 64 : index
    %c0_12 = arith.constant 0 : index
    %8 = vector.load %arg2[%c0_11, %c64, %c0_12] : memref<2x160x128xf32, #tpu.memory_space<vmem>>, vector<1x32x64xf32>
    %9 = vector.shape_cast %8 : vector<1x32x64xf32> to vector<32x64xf32>
    %c0_13 = arith.constant 0 : index
    %c96 = arith.constant 96 : index
    %c0_14 = arith.constant 0 : index
    %10 = vector.load %arg2[%c0_13, %c96, %c0_14] : memref<2x160x128xf32, #tpu.memory_space<vmem>>, vector<1x64x32xf32>
    %11 = vector.shape_cast %10 : vector<1x64x32xf32> to vector<64x32xf32>
    %12 = arith.mulf %0, %0 : vector<16x32xf32>
    %cst = arith.constant dense<0.000000e+00> : vector<16xf32>
    %13 = vector.multi_reduction <add>, %12, %cst [1] : vector<16x32xf32> to vector<16xf32>
    %14 = vector.shape_cast %13 : vector<16xf32> to vector<16x1xf32>
    %cst_15 = arith.constant 3.200000e+01 : f32
    %15 = vector.broadcast %cst_15 : f32 to vector<16x1xf32>
    %16 = arith.divf %14, %15 : vector<16x1xf32>
    %cst_16 = arith.constant 9.99999997E-7 : f32
    %17 = vector.broadcast %cst_16 : f32 to vector<16x1xf32>
    %18 = arith.addf %16, %17 : vector<16x1xf32>
    %19 = math.rsqrt %18 : vector<16x1xf32>
    %20 = vector.broadcast %19 : vector<16x1xf32> to vector<16x32xf32>
    %21 = arith.mulf %0, %20 : vector<16x32xf32>
    %22 = vector.broadcast %2 : vector<1x32xf32> to vector<16x32xf32>
    %23 = arith.mulf %21, %22 : vector<16x32xf32>
    %cst_17 = arith.constant dense<0.000000e+00> : vector<16x128xf32>
    %24 = tpu.matmul %23, %5, %cst_17 {dimension_numbers = #tpu.dot_dimension_numbers<[1], [0], [0], [1], [0, 0, 1, 1], [], []>} : vector<16x32xf32>, vector<32x128xf32>, vector<16x128xf32> -> vector<16x128xf32>
    %25 = vector.extract_strided_slice %24 {offsets = [0, 0], sizes = [16, 32], strides = [1, 1]} : vector<16x128xf32> to vector<16x32xf32>
    %26 = vector.extract_strided_slice %25 {offsets = [0, 0], sizes = [8, 32], strides = [1, 1]} : vector<16x32xf32> to vector<8x32xf32>
    %27 = vector.extract_strided_slice %26 {offsets = [0, 0], sizes = [8, 8], strides = [1, 1]} : vector<8x32xf32> to vector<8x8xf32>
    %28 = vector.extract_strided_slice %26 {offsets = [0, 8], sizes = [8, 8], strides = [1, 1]} : vector<8x32xf32> to vector<8x8xf32>
    %29 = vector.extract_strided_slice %26 {offsets = [0, 16], sizes = [8, 8], strides = [1, 1]} : vector<8x32xf32> to vector<8x8xf32>
    %30 = vector.extract_strided_slice %26 {offsets = [0, 24], sizes = [8, 8], strides = [1, 1]} : vector<8x32xf32> to vector<8x8xf32>
    %31 = vector.extract_strided_slice %25 {offsets = [8, 0], sizes = [8, 32], strides = [1, 1]} : vector<16x32xf32> to vector<8x32xf32>
    %32 = vector.extract_strided_slice %31 {offsets = [0, 0], sizes = [8, 8], strides = [1, 1]} : vector<8x32xf32> to vector<8x8xf32>
    %33 = vector.extract_strided_slice %31 {offsets = [0, 8], sizes = [8, 8], strides = [1, 1]} : vector<8x32xf32> to vector<8x8xf32>
    %34 = vector.extract_strided_slice %31 {offsets = [0, 16], sizes = [8, 8], strides = [1, 1]} : vector<8x32xf32> to vector<8x8xf32>
    %35 = vector.extract_strided_slice %31 {offsets = [0, 24], sizes = [8, 8], strides = [1, 1]} : vector<8x32xf32> to vector<8x8xf32>
    %36 = tpu.concatenate %27, %28, %29, %30, %32, %33, %34, %35 in 0 : vector<8x8xf32>, vector<8x8xf32>, vector<8x8xf32>, vector<8x8xf32>, vector<8x8xf32>, vector<8x8xf32>, vector<8x8xf32>, vector<8x8xf32> -> vector<64x8xf32>
    %37 = vector.extract_strided_slice %24 {offsets = [0, 32], sizes = [16, 32], strides = [1, 1]} : vector<16x128xf32> to vector<16x32xf32>
    %38 = vector.extract_strided_slice %37 {offsets = [0, 0], sizes = [8, 32], strides = [1, 1]} : vector<16x32xf32> to vector<8x32xf32>
    %39 = vector.extract_strided_slice %38 {offsets = [0, 0], sizes = [8, 8], strides = [1, 1]} : vector<8x32xf32> to vector<8x8xf32>
    %40 = vector.extract_strided_slice %38 {offsets = [0, 8], sizes = [8, 8], strides = [1, 1]} : vector<8x32xf32> to vector<8x8xf32>
    %41 = vector.extract_strided_slice %38 {offsets = [0, 16], sizes = [8, 8], strides = [1, 1]} : vector<8x32xf32> to vector<8x8xf32>
    %42 = vector.extract_strided_slice %38 {offsets = [0, 24], sizes = [8, 8], strides = [1, 1]} : vector<8x32xf32> to vector<8x8xf32>
    %43 = vector.extract_strided_slice %37 {offsets = [8, 0], sizes = [8, 32], strides = [1, 1]} : vector<16x32xf32> to vector<8x32xf32>
    %44 = vector.extract_strided_slice %43 {offsets = [0, 0], sizes = [8, 8], strides = [1, 1]} : vector<8x32xf32> to vector<8x8xf32>
    %45 = vector.extract_strided_slice %43 {offsets = [0, 8], sizes = [8, 8], strides = [1, 1]} : vector<8x32xf32> to vector<8x8xf32>
    %46 = vector.extract_strided_slice %43 {offsets = [0, 16], sizes = [8, 8], strides = [1, 1]} : vector<8x32xf32> to vector<8x8xf32>
    %47 = vector.extract_strided_slice %43 {offsets = [0, 24], sizes = [8, 8], strides = [1, 1]} : vector<8x32xf32> to vector<8x8xf32>
    %48 = tpu.concatenate %39, %40, %41, %42, %44, %45, %46, %47 in 0 : vector<8x8xf32>, vector<8x8xf32>, vector<8x8xf32>, vector<8x8xf32>, vector<8x8xf32>, vector<8x8xf32>, vector<8x8xf32>, vector<8x8xf32> -> vector<64x8xf32>
    %49 = vector.extract_strided_slice %24 {offsets = [0, 64], sizes = [16, 32], strides = [1, 1]} : vector<16x128xf32> to vector<16x32xf32>
    %50 = vector.extract_strided_slice %49 {offsets = [0, 0], sizes = [8, 32], strides = [1, 1]} : vector<16x32xf32> to vector<8x32xf32>
    %51 = vector.extract_strided_slice %50 {offsets = [0, 0], sizes = [8, 8], strides = [1, 1]} : vector<8x32xf32> to vector<8x8xf32>
    %52 = vector.extract_strided_slice %50 {offsets = [0, 8], sizes = [8, 8], strides = [1, 1]} : vector<8x32xf32> to vector<8x8xf32>
    %53 = vector.extract_strided_slice %50 {offsets = [0, 16], sizes = [8, 8], strides = [1, 1]} : vector<8x32xf32> to vector<8x8xf32>
    %54 = vector.extract_strided_slice %50 {offsets = [0, 24], sizes = [8, 8], strides = [1, 1]} : vector<8x32xf32> to vector<8x8xf32>
    %55 = vector.extract_strided_slice %49 {offsets = [8, 0], sizes = [8, 32], strides = [1, 1]} : vector<16x32xf32> to vector<8x32xf32>
    %56 = vector.extract_strided_slice %55 {offsets = [0, 0], sizes = [8, 8], strides = [1, 1]} : vector<8x32xf32> to vector<8x8xf32>
    %57 = vector.extract_strided_slice %55 {offsets = [0, 8], sizes = [8, 8], strides = [1, 1]} : vector<8x32xf32> to vector<8x8xf32>
    %58 = vector.extract_strided_slice %55 {offsets = [0, 16], sizes = [8, 8], strides = [1, 1]} : vector<8x32xf32> to vector<8x8xf32>
    %59 = vector.extract_strided_slice %55 {offsets = [0, 24], sizes = [8, 8], strides = [1, 1]} : vector<8x32xf32> to vector<8x8xf32>
    %60 = tpu.concatenate %51, %52, %53, %54, %56, %57, %58, %59 in 0 : vector<8x8xf32>, vector<8x8xf32>, vector<8x8xf32>, vector<8x8xf32>, vector<8x8xf32>, vector<8x8xf32>, vector<8x8xf32>, vector<8x8xf32> -> vector<64x8xf32>
    %cst_18 = arith.constant dense<0.000000e+00> : vector<64x64xf32>
    %61 = tpu.matmul %36, %48, %cst_18 {dimension_numbers = #tpu.dot_dimension_numbers<[1], [1], [0], [0], [0, 0, 1, 0], [], []>} : vector<64x8xf32>, vector<64x8xf32>, vector<64x64xf32> -> vector<64x64xf32>
    %62 = arith.addf %61, %1 : vector<64x64xf32>
    %cst_19 = arith.constant dense<0xFF800000> : vector<64xf32>
    %63 = vector.multi_reduction <maximumf>, %62, %cst_19 [1] : vector<64x64xf32> to vector<64xf32>
    %64 = vector.shape_cast %63 : vector<64xf32> to vector<64x1xf32>
    %65 = vector.broadcast %64 : vector<64x1xf32> to vector<64x64xf32>
    %66 = arith.subf %62, %65 : vector<64x64xf32>
    %67 = math.exp %66 : vector<64x64xf32>
    %cst_20 = arith.constant dense<0.000000e+00> : vector<64xf32>
    %68 = vector.multi_reduction <add>, %67, %cst_20 [1] : vector<64x64xf32> to vector<64xf32>
    %69 = vector.shape_cast %68 : vector<64xf32> to vector<64x1xf32>
    %70 = tpu.reciprocal %69 {approx = true} : vector<64x1xf32> -> vector<64x1xf32>
    %71 = vector.broadcast %70 : vector<64x1xf32> to vector<64x64xf32>
    %72 = arith.mulf %67, %71 : vector<64x64xf32>
    %cst_21 = arith.constant dense<0.000000e+00> : vector<64x8xf32>
    %73 = tpu.matmul %72, %60, %cst_21 {dimension_numbers = #tpu.dot_dimension_numbers<[1], [0], [0], [1], [0, 0, 1, 1], [], []>} : vector<64x64xf32>, vector<64x8xf32>, vector<64x8xf32> -> vector<64x8xf32>
    %74 = vector.extract_strided_slice %73 {offsets = [0, 0], sizes = [8, 8], strides = [1, 1]} : vector<64x8xf32> to vector<8x8xf32>
    %75 = vector.extract_strided_slice %73 {offsets = [8, 0], sizes = [8, 8], strides = [1, 1]} : vector<64x8xf32> to vector<8x8xf32>
    %76 = vector.extract_strided_slice %73 {offsets = [16, 0], sizes = [8, 8], strides = [1, 1]} : vector<64x8xf32> to vector<8x8xf32>
    %77 = vector.extract_strided_slice %73 {offsets = [24, 0], sizes = [8, 8], strides = [1, 1]} : vector<64x8xf32> to vector<8x8xf32>
    %78 = tpu.concatenate %74, %75, %76, %77 in 1 : vector<8x8xf32>, vector<8x8xf32>, vector<8x8xf32>, vector<8x8xf32> -> vector<8x32xf32>
    %79 = vector.extract_strided_slice %73 {offsets = [32, 0], sizes = [8, 8], strides = [1, 1]} : vector<64x8xf32> to vector<8x8xf32>
    %80 = vector.extract_strided_slice %73 {offsets = [40, 0], sizes = [8, 8], strides = [1, 1]} : vector<64x8xf32> to vector<8x8xf32>
    %81 = vector.extract_strided_slice %73 {offsets = [48, 0], sizes = [8, 8], strides = [1, 1]} : vector<64x8xf32> to vector<8x8xf32>
    %82 = vector.extract_strided_slice %73 {offsets = [56, 0], sizes = [8, 8], strides = [1, 1]} : vector<64x8xf32> to vector<8x8xf32>
    %83 = tpu.concatenate %79, %80, %81, %82 in 1 : vector<8x8xf32>, vector<8x8xf32>, vector<8x8xf32>, vector<8x8xf32> -> vector<8x32xf32>
    %84 = tpu.concatenate %78, %83 in 0 : vector<8x32xf32>, vector<8x32xf32> -> vector<16x32xf32>
    %cst_22 = arith.constant dense<0.000000e+00> : vector<16x32xf32>
    %85 = tpu.matmul %84, %7, %cst_22 {dimension_numbers = #tpu.dot_dimension_numbers<[1], [0], [0], [1], [0, 0, 1, 1], [], []>} : vector<16x32xf32>, vector<32x32xf32>, vector<16x32xf32> -> vector<16x32xf32>
    %86 = arith.addf %0, %85 : vector<16x32xf32>
    %87 = arith.mulf %86, %86 : vector<16x32xf32>
    %cst_23 = arith.constant dense<0.000000e+00> : vector<16xf32>
    %88 = vector.multi_reduction <add>, %87, %cst_23 [1] : vector<16x32xf32> to vector<16xf32>
    %89 = vector.shape_cast %88 : vector<16xf32> to vector<16x1xf32>
    %cst_24 = arith.constant 3.200000e+01 : f32
    %90 = vector.broadcast %cst_24 : f32 to vector<16x1xf32>
    %91 = arith.divf %89, %90 : vector<16x1xf32>
    %cst_25 = arith.constant 9.99999997E-7 : f32
    %92 = vector.broadcast %cst_25 : f32 to vector<16x1xf32>
    %93 = arith.addf %91, %92 : vector<16x1xf32>
    %94 = math.rsqrt %93 : vector<16x1xf32>
    %95 = vector.broadcast %94 : vector<16x1xf32> to vector<16x32xf32>
    %96 = arith.mulf %86, %95 : vector<16x32xf32>
    %97 = vector.broadcast %3 : vector<1x32xf32> to vector<16x32xf32>
    %98 = arith.mulf %96, %97 : vector<16x32xf32>
    %cst_26 = arith.constant dense<0.000000e+00> : vector<16x64xf32>
    %99 = tpu.matmul %98, %9, %cst_26 {dimension_numbers = #tpu.dot_dimension_numbers<[1], [0], [0], [1], [0, 0, 1, 1], [], []>} : vector<16x32xf32>, vector<32x64xf32>, vector<16x64xf32> -> vector<16x64xf32>
    %cst_27 = arith.constant 0.000000e+00 : f32
    %100 = vector.broadcast %cst_27 : f32 to vector<16x64xf32>
    %101 = arith.maximumf %99, %100 : vector<16x64xf32>
    %cst_28 = arith.constant dense<0.000000e+00> : vector<16x32xf32>
    %102 = tpu.matmul %101, %11, %cst_28 {dimension_numbers = #tpu.dot_dimension_numbers<[1], [0], [0], [1], [0, 0, 1, 1], [], []>} : vector<16x64xf32>, vector<64x32xf32>, vector<16x32xf32> -> vector<16x32xf32>
    %103 = arith.addf %86, %102 : vector<16x32xf32>
    %c1 = arith.constant 1 : index
    %c0_29 = arith.constant 0 : index
    %104 = vector.load %arg3[%c1, %c0_29] : memref<5x128xf32, #tpu.memory_space<vmem>>, vector<1x32xf32>
    %c3 = arith.constant 3 : index
    %c0_30 = arith.constant 0 : index
    %105 = vector.load %arg3[%c3, %c0_30] : memref<5x128xf32, #tpu.memory_space<vmem>>, vector<1x32xf32>
    %c1_31 = arith.constant 1 : index
    %c0_32 = arith.constant 0 : index
    %c0_33 = arith.constant 0 : index
    %106 = vector.load %arg2[%c1_31, %c0_32, %c0_33] : memref<2x160x128xf32, #tpu.memory_space<vmem>>, vector<1x32x128xf32>
    %107 = vector.shape_cast %106 : vector<1x32x128xf32> to vector<32x128xf32>
    %c1_34 = arith.constant 1 : index
    %c32_35 = arith.constant 32 : index
    %c0_36 = arith.constant 0 : index
    %108 = vector.load %arg2[%c1_34, %c32_35, %c0_36] : memref<2x160x128xf32, #tpu.memory_space<vmem>>, vector<1x32x32xf32>
    %109 = vector.shape_cast %108 : vector<1x32x32xf32> to vector<32x32xf32>
    %c1_37 = arith.constant 1 : index
    %c64_38 = arith.constant 64 : index
    %c0_39 = arith.constant 0 : index
    %110 = vector.load %arg2[%c1_37, %c64_38, %c0_39] : memref<2x160x128xf32, #tpu.memory_space<vmem>>, vector<1x32x64xf32>
    %111 = vector.shape_cast %110 : vector<1x32x64xf32> to vector<32x64xf32>
    %c1_40 = arith.constant 1 : index
    %c96_41 = arith.constant 96 : index
    %c0_42 = arith.constant 0 : index
    %112 = vector.load %arg2[%c1_40, %c96_41, %c0_42] : memref<2x160x128xf32, #tpu.memory_space<vmem>>, vector<1x64x32xf32>
    %113 = vector.shape_cast %112 : vector<1x64x32xf32> to vector<64x32xf32>
    %114 = arith.mulf %103, %103 : vector<16x32xf32>
    %cst_43 = arith.constant dense<0.000000e+00> : vector<16xf32>
    %115 = vector.multi_reduction <add>, %114, %cst_43 [1] : vector<16x32xf32> to vector<16xf32>
    %116 = vector.shape_cast %115 : vector<16xf32> to vector<16x1xf32>
    %cst_44 = arith.constant 3.200000e+01 : f32
    %117 = vector.broadcast %cst_44 : f32 to vector<16x1xf32>
    %118 = arith.divf %116, %117 : vector<16x1xf32>
    %cst_45 = arith.constant 9.99999997E-7 : f32
    %119 = vector.broadcast %cst_45 : f32 to vector<16x1xf32>
    %120 = arith.addf %118, %119 : vector<16x1xf32>
    %121 = math.rsqrt %120 : vector<16x1xf32>
    %122 = vector.broadcast %121 : vector<16x1xf32> to vector<16x32xf32>
    %123 = arith.mulf %103, %122 : vector<16x32xf32>
    %124 = vector.broadcast %104 : vector<1x32xf32> to vector<16x32xf32>
    %125 = arith.mulf %123, %124 : vector<16x32xf32>
    %cst_46 = arith.constant dense<0.000000e+00> : vector<16x128xf32>
    %126 = tpu.matmul %125, %107, %cst_46 {dimension_numbers = #tpu.dot_dimension_numbers<[1], [0], [0], [1], [0, 0, 1, 1], [], []>} : vector<16x32xf32>, vector<32x128xf32>, vector<16x128xf32> -> vector<16x128xf32>
    %127 = vector.extract_strided_slice %126 {offsets = [0, 0], sizes = [16, 32], strides = [1, 1]} : vector<16x128xf32> to vector<16x32xf32>
    %128 = vector.extract_strided_slice %127 {offsets = [0, 0], sizes = [8, 32], strides = [1, 1]} : vector<16x32xf32> to vector<8x32xf32>
    %129 = vector.extract_strided_slice %128 {offsets = [0, 0], sizes = [8, 8], strides = [1, 1]} : vector<8x32xf32> to vector<8x8xf32>
    %130 = vector.extract_strided_slice %128 {offsets = [0, 8], sizes = [8, 8], strides = [1, 1]} : vector<8x32xf32> to vector<8x8xf32>
    %131 = vector.extract_strided_slice %128 {offsets = [0, 16], sizes = [8, 8], strides = [1, 1]} : vector<8x32xf32> to vector<8x8xf32>
    %132 = vector.extract_strided_slice %128 {offsets = [0, 24], sizes = [8, 8], strides = [1, 1]} : vector<8x32xf32> to vector<8x8xf32>
    %133 = vector.extract_strided_slice %127 {offsets = [8, 0], sizes = [8, 32], strides = [1, 1]} : vector<16x32xf32> to vector<8x32xf32>
    %134 = vector.extract_strided_slice %133 {offsets = [0, 0], sizes = [8, 8], strides = [1, 1]} : vector<8x32xf32> to vector<8x8xf32>
    %135 = vector.extract_strided_slice %133 {offsets = [0, 8], sizes = [8, 8], strides = [1, 1]} : vector<8x32xf32> to vector<8x8xf32>
    %136 = vector.extract_strided_slice %133 {offsets = [0, 16], sizes = [8, 8], strides = [1, 1]} : vector<8x32xf32> to vector<8x8xf32>
    %137 = vector.extract_strided_slice %133 {offsets = [0, 24], sizes = [8, 8], strides = [1, 1]} : vector<8x32xf32> to vector<8x8xf32>
    %138 = tpu.concatenate %129, %130, %131, %132, %134, %135, %136, %137 in 0 : vector<8x8xf32>, vector<8x8xf32>, vector<8x8xf32>, vector<8x8xf32>, vector<8x8xf32>, vector<8x8xf32>, vector<8x8xf32>, vector<8x8xf32> -> vector<64x8xf32>
    %139 = vector.extract_strided_slice %126 {offsets = [0, 32], sizes = [16, 32], strides = [1, 1]} : vector<16x128xf32> to vector<16x32xf32>
    %140 = vector.extract_strided_slice %139 {offsets = [0, 0], sizes = [8, 32], strides = [1, 1]} : vector<16x32xf32> to vector<8x32xf32>
    %141 = vector.extract_strided_slice %140 {offsets = [0, 0], sizes = [8, 8], strides = [1, 1]} : vector<8x32xf32> to vector<8x8xf32>
    %142 = vector.extract_strided_slice %140 {offsets = [0, 8], sizes = [8, 8], strides = [1, 1]} : vector<8x32xf32> to vector<8x8xf32>
    %143 = vector.extract_strided_slice %140 {offsets = [0, 16], sizes = [8, 8], strides = [1, 1]} : vector<8x32xf32> to vector<8x8xf32>
    %144 = vector.extract_strided_slice %140 {offsets = [0, 24], sizes = [8, 8], strides = [1, 1]} : vector<8x32xf32> to vector<8x8xf32>
    %145 = vector.extract_strided_slice %139 {offsets = [8, 0], sizes = [8, 32], strides = [1, 1]} : vector<16x32xf32> to vector<8x32xf32>
    %146 = vector.extract_strided_slice %145 {offsets = [0, 0], sizes = [8, 8], strides = [1, 1]} : vector<8x32xf32> to vector<8x8xf32>
    %147 = vector.extract_strided_slice %145 {offsets = [0, 8], sizes = [8, 8], strides = [1, 1]} : vector<8x32xf32> to vector<8x8xf32>
    %148 = vector.extract_strided_slice %145 {offsets = [0, 16], sizes = [8, 8], strides = [1, 1]} : vector<8x32xf32> to vector<8x8xf32>
    %149 = vector.extract_strided_slice %145 {offsets = [0, 24], sizes = [8, 8], strides = [1, 1]} : vector<8x32xf32> to vector<8x8xf32>
    %150 = tpu.concatenate %141, %142, %143, %144, %146, %147, %148, %149 in 0 : vector<8x8xf32>, vector<8x8xf32>, vector<8x8xf32>, vector<8x8xf32>, vector<8x8xf32>, vector<8x8xf32>, vector<8x8xf32>, vector<8x8xf32> -> vector<64x8xf32>
    %151 = vector.extract_strided_slice %126 {offsets = [0, 64], sizes = [16, 32], strides = [1, 1]} : vector<16x128xf32> to vector<16x32xf32>
    %152 = vector.extract_strided_slice %151 {offsets = [0, 0], sizes = [8, 32], strides = [1, 1]} : vector<16x32xf32> to vector<8x32xf32>
    %153 = vector.extract_strided_slice %152 {offsets = [0, 0], sizes = [8, 8], strides = [1, 1]} : vector<8x32xf32> to vector<8x8xf32>
    %154 = vector.extract_strided_slice %152 {offsets = [0, 8], sizes = [8, 8], strides = [1, 1]} : vector<8x32xf32> to vector<8x8xf32>
    %155 = vector.extract_strided_slice %152 {offsets = [0, 16], sizes = [8, 8], strides = [1, 1]} : vector<8x32xf32> to vector<8x8xf32>
    %156 = vector.extract_strided_slice %152 {offsets = [0, 24], sizes = [8, 8], strides = [1, 1]} : vector<8x32xf32> to vector<8x8xf32>
    %157 = vector.extract_strided_slice %151 {offsets = [8, 0], sizes = [8, 32], strides = [1, 1]} : vector<16x32xf32> to vector<8x32xf32>
    %158 = vector.extract_strided_slice %157 {offsets = [0, 0], sizes = [8, 8], strides = [1, 1]} : vector<8x32xf32> to vector<8x8xf32>
    %159 = vector.extract_strided_slice %157 {offsets = [0, 8], sizes = [8, 8], strides = [1, 1]} : vector<8x32xf32> to vector<8x8xf32>
    %160 = vector.extract_strided_slice %157 {offsets = [0, 16], sizes = [8, 8], strides = [1, 1]} : vector<8x32xf32> to vector<8x8xf32>
    %161 = vector.extract_strided_slice %157 {offsets = [0, 24], sizes = [8, 8], strides = [1, 1]} : vector<8x32xf32> to vector<8x8xf32>
    %162 = tpu.concatenate %153, %154, %155, %156, %158, %159, %160, %161 in 0 : vector<8x8xf32>, vector<8x8xf32>, vector<8x8xf32>, vector<8x8xf32>, vector<8x8xf32>, vector<8x8xf32>, vector<8x8xf32>, vector<8x8xf32> -> vector<64x8xf32>
    %cst_47 = arith.constant dense<0.000000e+00> : vector<64x64xf32>
    %163 = tpu.matmul %138, %150, %cst_47 {dimension_numbers = #tpu.dot_dimension_numbers<[1], [1], [0], [0], [0, 0, 1, 0], [], []>} : vector<64x8xf32>, vector<64x8xf32>, vector<64x64xf32> -> vector<64x64xf32>
    %164 = arith.addf %163, %1 : vector<64x64xf32>
    %cst_48 = arith.constant dense<0xFF800000> : vector<64xf32>
    %165 = vector.multi_reduction <maximumf>, %164, %cst_48 [1] : vector<64x64xf32> to vector<64xf32>
    %166 = vector.shape_cast %165 : vector<64xf32> to vector<64x1xf32>
    %167 = vector.broadcast %166 : vector<64x1xf32> to vector<64x64xf32>
    %168 = arith.subf %164, %167 : vector<64x64xf32>
    %169 = math.exp %168 : vector<64x64xf32>
    %cst_49 = arith.constant dense<0.000000e+00> : vector<64xf32>
    %170 = vector.multi_reduction <add>, %169, %cst_49 [1] : vector<64x64xf32> to vector<64xf32>
    %171 = vector.shape_cast %170 : vector<64xf32> to vector<64x1xf32>
    %172 = tpu.reciprocal %171 {approx = true} : vector<64x1xf32> -> vector<64x1xf32>
    %173 = vector.broadcast %172 : vector<64x1xf32> to vector<64x64xf32>
    %174 = arith.mulf %169, %173 : vector<64x64xf32>
    %cst_50 = arith.constant dense<0.000000e+00> : vector<64x8xf32>
    %175 = tpu.matmul %174, %162, %cst_50 {dimension_numbers = #tpu.dot_dimension_numbers<[1], [0], [0], [1], [0, 0, 1, 1], [], []>} : vector<64x64xf32>, vector<64x8xf32>, vector<64x8xf32> -> vector<64x8xf32>
    %176 = vector.extract_strided_slice %175 {offsets = [0, 0], sizes = [8, 8], strides = [1, 1]} : vector<64x8xf32> to vector<8x8xf32>
    %177 = vector.extract_strided_slice %175 {offsets = [8, 0], sizes = [8, 8], strides = [1, 1]} : vector<64x8xf32> to vector<8x8xf32>
    %178 = vector.extract_strided_slice %175 {offsets = [16, 0], sizes = [8, 8], strides = [1, 1]} : vector<64x8xf32> to vector<8x8xf32>
    %179 = vector.extract_strided_slice %175 {offsets = [24, 0], sizes = [8, 8], strides = [1, 1]} : vector<64x8xf32> to vector<8x8xf32>
    %180 = tpu.concatenate %176, %177, %178, %179 in 1 : vector<8x8xf32>, vector<8x8xf32>, vector<8x8xf32>, vector<8x8xf32> -> vector<8x32xf32>
    %181 = vector.extract_strided_slice %175 {offsets = [32, 0], sizes = [8, 8], strides = [1, 1]} : vector<64x8xf32> to vector<8x8xf32>
    %182 = vector.extract_strided_slice %175 {offsets = [40, 0], sizes = [8, 8], strides = [1, 1]} : vector<64x8xf32> to vector<8x8xf32>
    %183 = vector.extract_strided_slice %175 {offsets = [48, 0], sizes = [8, 8], strides = [1, 1]} : vector<64x8xf32> to vector<8x8xf32>
    %184 = vector.extract_strided_slice %175 {offsets = [56, 0], sizes = [8, 8], strides = [1, 1]} : vector<64x8xf32> to vector<8x8xf32>
    %185 = tpu.concatenate %181, %182, %183, %184 in 1 : vector<8x8xf32>, vector<8x8xf32>, vector<8x8xf32>, vector<8x8xf32> -> vector<8x32xf32>
    %186 = tpu.concatenate %180, %185 in 0 : vector<8x32xf32>, vector<8x32xf32> -> vector<16x32xf32>
    %cst_51 = arith.constant dense<0.000000e+00> : vector<16x32xf32>
    %187 = tpu.matmul %186, %109, %cst_51 {dimension_numbers = #tpu.dot_dimension_numbers<[1], [0], [0], [1], [0, 0, 1, 1], [], []>} : vector<16x32xf32>, vector<32x32xf32>, vector<16x32xf32> -> vector<16x32xf32>
    %188 = arith.addf %103, %187 : vector<16x32xf32>
    %189 = arith.mulf %188, %188 : vector<16x32xf32>
    %cst_52 = arith.constant dense<0.000000e+00> : vector<16xf32>
    %190 = vector.multi_reduction <add>, %189, %cst_52 [1] : vector<16x32xf32> to vector<16xf32>
    %191 = vector.shape_cast %190 : vector<16xf32> to vector<16x1xf32>
    %cst_53 = arith.constant 3.200000e+01 : f32
    %192 = vector.broadcast %cst_53 : f32 to vector<16x1xf32>
    %193 = arith.divf %191, %192 : vector<16x1xf32>
    %cst_54 = arith.constant 9.99999997E-7 : f32
    %194 = vector.broadcast %cst_54 : f32 to vector<16x1xf32>
    %195 = arith.addf %193, %194 : vector<16x1xf32>
    %196 = math.rsqrt %195 : vector<16x1xf32>
    %197 = vector.broadcast %196 : vector<16x1xf32> to vector<16x32xf32>
    %198 = arith.mulf %188, %197 : vector<16x32xf32>
    %199 = vector.broadcast %105 : vector<1x32xf32> to vector<16x32xf32>
    %200 = arith.mulf %198, %199 : vector<16x32xf32>
    %cst_55 = arith.constant dense<0.000000e+00> : vector<16x64xf32>
    %201 = tpu.matmul %200, %111, %cst_55 {dimension_numbers = #tpu.dot_dimension_numbers<[1], [0], [0], [1], [0, 0, 1, 1], [], []>} : vector<16x32xf32>, vector<32x64xf32>, vector<16x64xf32> -> vector<16x64xf32>
    %cst_56 = arith.constant 0.000000e+00 : f32
    %202 = vector.broadcast %cst_56 : f32 to vector<16x64xf32>
    %203 = arith.maximumf %201, %202 : vector<16x64xf32>
    %cst_57 = arith.constant dense<0.000000e+00> : vector<16x32xf32>
    %204 = tpu.matmul %203, %113, %cst_57 {dimension_numbers = #tpu.dot_dimension_numbers<[1], [0], [0], [1], [0, 0, 1, 1], [], []>} : vector<16x64xf32>, vector<64x32xf32>, vector<16x32xf32> -> vector<16x32xf32>
    %205 = arith.addf %188, %204 : vector<16x32xf32>
    %206 = vector.extract_strided_slice %205 {offsets = [7, 0], sizes = [1, 32], strides = [1, 1]} : vector<16x32xf32> to vector<1x32xf32>
    %207 = vector.extract_strided_slice %205 {offsets = [15, 0], sizes = [1, 32], strides = [1, 1]} : vector<16x32xf32> to vector<1x32xf32>
    %208 = tpu.concatenate %206, %207 in 0 : vector<1x32xf32>, vector<1x32xf32> -> vector<2x32xf32>
    %c4 = arith.constant 4 : index
    %c0_58 = arith.constant 0 : index
    %209 = vector.load %arg3[%c4, %c0_58] : memref<5x128xf32, #tpu.memory_space<vmem>>, vector<1x32xf32>
    %210 = arith.mulf %208, %208 : vector<2x32xf32>
    %cst_59 = arith.constant dense<0.000000e+00> : vector<2xf32>
    %211 = vector.multi_reduction <add>, %210, %cst_59 [1] : vector<2x32xf32> to vector<2xf32>
    %212 = vector.shape_cast %211 : vector<2xf32> to vector<2x1xf32>
    %cst_60 = arith.constant 3.200000e+01 : f32
    %213 = vector.broadcast %cst_60 : f32 to vector<2x1xf32>
    %214 = arith.divf %212, %213 : vector<2x1xf32>
    %cst_61 = arith.constant 9.99999997E-7 : f32
    %215 = vector.broadcast %cst_61 : f32 to vector<2x1xf32>
    %216 = arith.addf %214, %215 : vector<2x1xf32>
    %217 = math.rsqrt %216 : vector<2x1xf32>
    %218 = vector.broadcast %217 : vector<2x1xf32> to vector<2x32xf32>
    %219 = arith.mulf %208, %218 : vector<2x32xf32>
    %220 = vector.broadcast %209 : vector<1x32xf32> to vector<2x32xf32>
    %221 = arith.mulf %219, %220 : vector<2x32xf32>
    %c0_62 = arith.constant 0 : index
    %c0_63 = arith.constant 0 : index
    %222 = vector.load %arg4[%c0_62, %c0_63] : memref<33x256xf32, #tpu.memory_space<vmem>>, vector<32x256xf32>
    %cst_64 = arith.constant dense<0.000000e+00> : vector<2x256xf32>
    %223 = tpu.matmul %221, %222, %cst_64 {dimension_numbers = #tpu.dot_dimension_numbers<[1], [0], [0], [1], [0, 0, 1, 1], [], []>} : vector<2x32xf32>, vector<32x256xf32>, vector<2x256xf32> -> vector<2x256xf32>
    %c32_65 = arith.constant 32 : index
    %c0_66 = arith.constant 0 : index
    %224 = vector.load %arg4[%c32_65, %c0_66] : memref<33x256xf32, #tpu.memory_space<vmem>>, vector<1x256xf32>
    %225 = vector.broadcast %224 : vector<1x256xf32> to vector<2x256xf32>
    %226 = arith.addf %223, %225 : vector<2x256xf32>
    %c0_67 = arith.constant 0 : index
    %c0_68 = arith.constant 0 : index
    %227 = vector.load %arg5[%c0_67, %c0_68] : memref<2x256xf32, #tpu.memory_space<vmem>>, vector<2x256xf32>
    tpu.vector_store %arg5[%c0_67, %c0_68], %226 {strides = array<i32>} : memref<2x256xf32, #tpu.memory_space<vmem>>, vector<2x256xf32>,
    return
  }
}

</mosaic_0001>

<llo_original>
// kernel: music_t5_forward.1
$region0: #{music_t5_forward.1}
  #allocation0 [shape = 'u32[]', space=smem, size = 0x4, offset = 0x4, fixed_abs, tag = 'smem constant byte address 0x4 - core index']
  #allocation1 [shape = 'u32[72,128]{1,0:T(1,128)}', space=vmem, size = 0x9000, scoped, tag = 'internal scratch']
  %s0 = inlined_call_operand.vmem [shape: f32[16,32], index: 0, kind: input, shape index: {}]
  %s1 = inlined_call_operand.vmem [shape: f32[64,64], index: 1, kind: input, shape index: {}]
  %s2 = inlined_call_operand.hbm [shape: f32[2,160,128], index: 2, kind: input, shape index: {}]
  %s3 = inlined_call_operand.vmem [shape: f32[5,128], index: 3, kind: input, shape index: {}]
  %s4 = inlined_call_operand.vmem [shape: f32[33,256], index: 4, kind: input, shape index: {}]
  %s5 = inlined_call_operand.vmem [shape: f32[2,256], index: 5, kind: output, shape index: {}]
  %s6 = sld [smem:[#allocation0]]
  $region34: #{music_t5_forward.1} parent=0
    _
  %s8 = ssub.s32 1, %s6
  %s9 = scalar_select 0, %s8, %s6
  $region1: #{music_t5_forward.1} parent=0
    #allocation2 [shape = 'u8[163840]{0}', space=vmem, size = 0x28000, scoped, tag = 'input window, operand 2, single buffered']
    #allocation3 [shape = 's32[1]{0}', space=sflag, size = 0x4, scoped, tag = 'scoped memory for music_t5_forward.1']
    %10 = vsyncpa [#allocation3], 0
    // Predicated region
    $region2: #{music_t5_forward.1} parent=1 // pred_check
      _
    $region3: #{music_t5_forward.1} parent=1 // pred_check_branch
      %12 = sbr.rel (0) target = $region5
    $region4: #{music_t5_forward.1} parent=1 // pred_region
      _
    $region5: #{music_t5_forward.1} parent=1 // pred_fallthru
      _
    // Predicated region
    $region6: #{music_t5_forward.1} parent=1 // pred_check
      _
    $region7: #{music_t5_forward.1} parent=1 // pred_check_branch
      %14 = sbr.rel (0) target = $region9
    $region8: #{music_t5_forward.1} parent=1 // pred_region
      _
    $region9: #{music_t5_forward.1} parent=1 // pred_fallthru
      _
    // Predicated region
    $region10: #{music_t5_forward.1} parent=1 // pred_check
      _
    $region11: #{music_t5_forward.1} parent=1 // pred_check_branch
      %16 = sbr.rel (0) target = $region13
    $region12: #{music_t5_forward.1} parent=1 // pred_region
      %18 = vsyncadd [#allocation3], 0
      %s19 = sshll.u32 %s2, 4
      %s20 = int_to_ptr.hbm [resolvable:$true] %s19
      %s21 = sshll.u32 [#allocation2], 4
      %s22 = int_to_ptr.vmem [resolvable:$true] %s21
      %27 = dma.hbm_to_vmem [thread:$0]  %s20, 5120, %s22, [#allocation3], 128, 128, 8
    $region13: #{music_t5_forward.1} parent=1 // pred_fallthru
      _
    // Predicated region
    $region14: #{music_t5_forward.1} parent=1 // pred_check
      _
    $region15: #{music_t5_forward.1} parent=1 // pred_check_branch
      %29 = sbr.rel (0) target = $region17
    $region16: #{music_t5_forward.1} parent=1 // pred_region
      _
    $region17: #{music_t5_forward.1} parent=1 // pred_fallthru
      _
    // Predicated region
    $region18: #{music_t5_forward.1} parent=1 // pred_check
      _
    $region19: #{music_t5_forward.1} parent=1 // pred_check_branch
      %31 = sbr.rel (0) target = $region21
    $region20: #{music_t5_forward.1} parent=1 // pred_region
      _
    $region21: #{music_t5_forward.1} parent=1 // pred_fallthru
      _
    // Predicated region
    $region22: #{music_t5_forward.1} parent=1 // pred_check
      _
    $region23: #{music_t5_forward.1} parent=1 // pred_check_branch
      %33 = sbr.rel (0) target = $region25
    $region24: #{music_t5_forward.1} parent=1 // pred_region
      %35 = dma.done [#allocation3], 5120
    $region25: #{music_t5_forward.1} parent=1 // pred_fallthru
      _
    %v36 = vld [vmem:[%s0] sm:$0xff]
    %v37 = vld [vmem:[%s0 + $0x8] sm:$0xff]
    %v38 = vld [vmem:[%s1] sm:$0xff]
    %v39 = vld [vmem:[%s1 + $0x8] sm:$0xff]
    %v40 = vld [vmem:[%s1 + $0x10] sm:$0xff]
    %v41 = vld [vmem:[%s1 + $0x18] sm:$0xff]
    %v42 = vld [vmem:[%s1 + $0x20] sm:$0xff]
    %v43 = vld [vmem:[%s1 + $0x28] sm:$0xff]
    %v44 = vld [vmem:[%s1 + $0x30] sm:$0xff]
    %v45 = vld [vmem:[%s1 + $0x38] sm:$0xff]
    %v46 = vld [vmem:[%s3] sm:$0x1]
    %v47 = vld [vmem:[%s3 + $0x2] sm:$0x1]
    %v48 = vld [vmem:[#allocation2] sm:$0xff]
    %v49 = vld [vmem:[#allocation2 + $0x8] sm:$0xff]
    %v50 = vld [vmem:[#allocation2 + $0x10] sm:$0xff]
    %v51 = vld [vmem:[#allocation2 + $0x18] sm:$0xff]
    %v52 = vld [vmem:[#allocation2 + $0x20] sm:$0xff]
    %v53 = vld [vmem:[#allocation2 + $0x28] sm:$0xff]
    %v54 = vld [vmem:[#allocation2 + $0x30] sm:$0xff]
    %v55 = vld [vmem:[#allocation2 + $0x38] sm:$0xff]
    %v56 = vld [vmem:[#allocation2 + $0x40] sm:$0xff]
    %v57 = vld [vmem:[#allocation2 + $0x48] sm:$0xff]
    %v58 = vld [vmem:[#allocation2 + $0x50] sm:$0xff]
    %v59 = vld [vmem:[#allocation2 + $0x58] sm:$0xff]
    %v60 = vld [vmem:[#allocation2 + $0x60] sm:$0xff]
    %v61 = vld [vmem:[#allocation2 + $0x68] sm:$0xff]
    %v62 = vld [vmem:[#allocation2 + $0x70] sm:$0xff]
    %v63 = vld [vmem:[#allocation2 + $0x78] sm:$0xff]
    %v64 = vld [vmem:[#allocation2 + $0x80] sm:$0xff]
    %v65 = vld [vmem:[#allocation2 + $0x88] sm:$0xff]
    %v66 = vld [vmem:[#allocation2 + $0x90] sm:$0xff]
    %v67 = vld [vmem:[#allocation2 + $0x98] sm:$0xff]
    %v68 = vmul.f32 %v36, %v36
    %v69 = vmul.f32 %v37, %v37
    %vm70 = vcmask 261120
    %v71 = vsel %vm70, %v68, 0.0
    %72 = vadd.xlane.f32.xlu0 %v71
    %v73 = vpop.xlane.xlu0 %72
    %v74 = vsel %vm70, %v69, 0.0
    %75 = vadd.xlane.f32.xlu0 %v74
    %v76 = vpop.xlane.xlu0 %75
    %v77 = vrcp.pop 32.0
    %v78 = vmul.f32 32.0, %v77
    %v79 = vsub.f32 1.0, %v78
    %v80 = vmul.f32 %v77, %v79
    %v81 = vadd.f32 %v77, %v80
    %vm82 = vweird.f32 %v77
    %v83 = vsel %vm82, %v77, %v81
    %v84 = vmul.f32 %v73, %v83
    %v85 = vmul.f32 %v76, %v83
    %v86 = vadd.f32 %v84, 1e-06
    %v87 = vadd.f32 %v85, 1e-06
    %v88 = vrsqrt.pop %v86
    %v89 = vmul.f32 %v88, %v86
    %v90 = vmul.f32 %v89, %v88
    %v91 = vmul.f32 0.5, %v90
    %v92 = vsub.f32 1.5, %v91
    %v93 = vmul.f32 %v88, %v92
    %vm94 = vweird.f32 %v86
    %vm95 = vweird.f32 %v88
    %vm96 = vmor %vm94, %vm95
    %v97 = vsel %vm96, %v88, %v93
    %v98 = vrsqrt.pop %v87
    %v99 = vmul.f32 %v98, %v87
    %v100 = vmul.f32 %v99, %v98
    %v101 = vmul.f32 0.5, %v100
    %v102 = vsub.f32 1.5, %v101
    %v103 = vmul.f32 %v98, %v102
    %vm104 = vweird.f32 %v87
    %vm105 = vweird.f32 %v98
    %vm106 = vmor %vm104, %vm105
    %v107 = vsel %vm106, %v98, %v103
    %v108 = vmul.f32 %v36, %v97
    %v109 = vmul.f32 %v37, %v107
    %v110 = vperm.slane %v46, 0
    %v111 = vmul.f32 %v108, %v110
    %v112 = vmul.f32 %v109, %v110
    %v114 = vsel %vm70, %v111, 0
    %v117 = vsel %vm70, %v112, 0
    %119 = vmatpush.msra.mxu0 0.0
    %120 = vmatpush.msra.mxu0 0.0
    %121 = vmatpush.msra.mxu0 0.0
    %122 = vmatpush.msra.mxu0 0.0
    %123 = vmatpush.msra.mxu0 0.0
    %124 = vmatpush.msra.mxu0 0.0
    %125 = vmatpush.msra.mxu0 0.0
    %126 = vmatpush.msra.mxu0 0.0
    %127 = vmatpush.msra.mxu0 0.0
    %128 = vmatpush.msra.mxu0 0.0
    %129 = vmatpush.msra.mxu0 0.0
    %130 = vmatpush.msra.mxu0 0.0
    %131 = vmatpush.msra.mxu0 %v51
    %132 = vmatpush.msra.mxu0 %v50
    %133 = vmatpush.msra.mxu0 %v49
    %134 = vmatpush.msra.mxu0 %v48
    %135 = vmatmul.f32.gmra.mxu0 %v114
    %v136 = vpop.f32.mrf.mxu0
    %v137 = vadd.f32 0.0, %v136
    %138 = vmatmul.f32.gmra.mxu0 %v117
    %v139 = vpop.f32.mrf.mxu0
    %v140 = vadd.f32 0.0, %v139
    %141 = vdwg.mxu0
    %143 = vrot.lane.b32.xlu0 %v137, 120
    %v144 = vpop.permute.xlu0 %143
    %145 = vrot.lane.b32.xlu0 %v137, 112
    %v146 = vpop.permute.xlu0 %145
    %147 = vrot.lane.b32.xlu0 %v137, 104
    %v148 = vpop.permute.xlu0 %147
    %150 = vrot.lane.b32.xlu0 %v140, 120
    %v151 = vpop.permute.xlu0 %150
    %152 = vrot.lane.b32.xlu0 %v140, 112
    %v153 = vpop.permute.xlu0 %152
    %154 = vrot.lane.b32.xlu0 %v140, 104
    %v155 = vpop.permute.xlu0 %154
    %156 = vrot.lane.b32.xlu0 %v137, 96
    %v157 = vpop.permute.xlu0 %156
    %158 = vrot.lane.b32.xlu0 %v144, 96
    %v159 = vpop.permute.xlu0 %158
    %160 = vrot.lane.b32.xlu0 %v146, 96
    %v161 = vpop.permute.xlu0 %160
    %162 = vrot.lane.b32.xlu0 %v148, 96
    %v163 = vpop.permute.xlu0 %162
    %164 = vrot.lane.b32.xlu0 %v140, 96
    %v165 = vpop.permute.xlu0 %164
    %166 = vrot.lane.b32.xlu0 %v151, 96
    %v167 = vpop.permute.xlu0 %166
    %168 = vrot.lane.b32.xlu0 %v153, 96
    %v169 = vpop.permute.xlu0 %168
    %170 = vrot.lane.b32.xlu0 %v155, 96
    %v171 = vpop.permute.xlu0 %170
    %vm172 = vcmask 64512
    %v173 = vsel %vm172, %v137, 0
    %v175 = vsel %vm172, %v144, 0
    %v177 = vsel %vm172, %v146, 0
    %v179 = vsel %vm172, %v148, 0
    %v181 = vsel %vm172, %v140, 0
    %v183 = vsel %vm172, %v151, 0
    %v185 = vsel %vm172, %v153, 0
    %v187 = vsel %vm172, %v155, 0
    %v189 = vsel %vm172, %v157, 0
    %v191 = vsel %vm172, %v159, 0
    %v193 = vsel %vm172, %v161, 0
    %v195 = vsel %vm172, %v163, 0
    %v197 = vsel %vm172, %v165, 0
    %v199 = vsel %vm172, %v167, 0
    %v201 = vsel %vm172, %v169, 0
    %v203 = vsel %vm172, %v171, 0
    %205 = vmatpush.xpose.msra.mxu0 0.0
    %206 = vmatpush.xpose.msra.mxu0 0.0
    %207 = vmatpush.xpose.msra.mxu0 0.0
    %208 = vmatpush.xpose.msra.mxu0 0.0
    %209 = vmatpush.xpose.msra.mxu0 0.0
    %210 = vmatpush.xpose.msra.mxu0 0.0
    %211 = vmatpush.xpose.msra.mxu0 0.0
    %212 = vmatpush.xpose.msra.mxu0 0.0
    %213 = vmatpush.xpose.msra.mxu0 %v203
    %214 = vmatpush.xpose.msra.mxu0 %v201
    %215 = vmatpush.xpose.msra.mxu0 %v199
    %216 = vmatpush.xpose.msra.mxu0 %v197
    %217 = vmatpush.xpose.msra.mxu0 %v195
    %218 = vmatpush.xpose.msra.mxu0 %v193
    %219 = vmatpush.xpose.msra.mxu0 %v191
    %220 = vmatpush.xpose.msra.mxu0 %v189
    %221 = vmatmul.f32.gmra.mxu0 %v173
    %v222 = vpop.f32.mrf.mxu0
    %v223 = vadd.f32 %v38, %v222
    %224 = vmatmul.f32.gmra.mxu0 %v175
    %v225 = vpop.f32.mrf.mxu0
    %v226 = vadd.f32 %v39, %v225
    %227 = vmatmul.f32.gmra.mxu0 %v177
    %v228 = vpop.f32.mrf.mxu0
    %v229 = vadd.f32 %v40, %v228
    %230 = vmatmul.f32.gmra.mxu0 %v179
    %v231 = vpop.f32.mrf.mxu0
    %v232 = vadd.f32 %v41, %v231
    %233 = vmatmul.f32.gmra.mxu0 %v181
    %v234 = vpop.f32.mrf.mxu0
    %v235 = vadd.f32 %v42, %v234
    %236 = vmatmul.f32.gmra.mxu0 %v183
    %v237 = vpop.f32.mrf.mxu0
    %v238 = vadd.f32 %v43, %v237
    %239 = vmatmul.f32.gmra.mxu0 %v185
    %v240 = vpop.f32.mrf.mxu0
    %v241 = vadd.f32 %v44, %v240
    %242 = vmatmul.f32.gmra.mxu0 %v187
    %v243 = vpop.f32.mrf.mxu0
    %v244 = vadd.f32 %v45, %v243
    %245 = vdwg.mxu0
    %vm246 = vcmask 523264
    %v247 = vsel %vm246, %v223, -inf
    %248 = vmax.xlane.f32.xlu0 %v247
    %v249 = vpop.xlane.xlu0 %248
    %v250 = vsel %vm246, %v226, -inf
    %251 = vmax.xlane.f32.xlu0 %v250
    %v252 = vpop.xlane.xlu0 %251
    %v253 = vsel %vm246, %v229, -inf
    %254 = vmax.xlane.f32.xlu0 %v253
    %v255 = vpop.xlane.xlu0 %254
    %v256 = vsel %vm246, %v232, -inf
    %257 = vmax.xlane.f32.xlu0 %v256
    %v258 = vpop.xlane.xlu0 %257
    %v259 = vsel %vm246, %v235, -inf
    %260 = vmax.xlane.f32.xlu0 %v259
    %v261 = vpop.xlane.xlu0 %260
    %v262 = vsel %vm246, %v238, -inf
    %263 = vmax.xlane.f32.xlu0 %v262
    %v264 = vpop.xlane.xlu0 %263
    %v265 = vsel %vm246, %v241, -inf
    %266 = vmax.xlane.f32.xlu0 %v265
    %v267 = vpop.xlane.xlu0 %266
    %v268 = vsel %vm246, %v244, -inf
    %269 = vmax.xlane.f32.xlu0 %v268
    %v270 = vpop.xlane.xlu0 %269
    %v271 = vsub.f32 %v223, %v249
    %v272 = vsub.f32 %v226, %v252
    %v273 = vsub.f32 %v229, %v255
    %v274 = vsub.f32 %v232, %v258
    %v275 = vsub.f32 %v235, %v261
    %v276 = vsub.f32 %v238, %v264
    %v277 = vsub.f32 %v241, %v267
    %v278 = vsub.f32 %v244, %v270
    %v279 = vmul.f32 %v271, 1.442695
    %v280 = vpow.pop %v279
    %v281 = vmul.f32 %v272, 1.442695
    %v282 = vpow.pop %v281
    %v283 = vmul.f32 %v273, 1.442695
    %v284 = vpow.pop %v283
    %v285 = vmul.f32 %v274, 1.442695
    %v286 = vpow.pop %v285
    %v287 = vmul.f32 %v275, 1.442695
    %v288 = vpow.pop %v287
    %v289 = vmul.f32 %v276, 1.442695
    %v290 = vpow.pop %v289
    %v291 = vmul.f32 %v277, 1.442695
    %v292 = vpow.pop %v291
    %v293 = vmul.f32 %v278, 1.442695
    %v294 = vpow.pop %v293
    %v295 = vsel %vm246, %v280, 0.0
    %296 = vadd.xlane.f32.xlu0 %v295
    %v297 = vpop.xlane.xlu0 %296
    %v298 = vsel %vm246, %v282, 0.0
    %299 = vadd.xlane.f32.xlu0 %v298
    %v300 = vpop.xlane.xlu0 %299
    %v301 = vsel %vm246, %v284, 0.0
    %302 = vadd.xlane.f32.xlu0 %v301
    %v303 = vpop.xlane.xlu0 %302
    %v304 = vsel %vm246, %v286, 0.0
    %305 = vadd.xlane.f32.xlu0 %v304
    %v306 = vpop.xlane.xlu0 %305
    %v307 = vsel %vm246, %v288, 0.0
    %308 = vadd.xlane.f32.xlu0 %v307
    %v309 = vpop.xlane.xlu0 %308
    %v310 = vsel %vm246, %v290, 0.0
    %311 = vadd.xlane.f32.xlu0 %v310
    %v312 = vpop.xlane.xlu0 %311
    %v313 = vsel %vm246, %v292, 0.0
    %314 = vadd.xlane.f32.xlu0 %v313
    %v315 = vpop.xlane.xlu0 %314
    %v316 = vsel %vm246, %v294, 0.0
    %317 = vadd.xlane.f32.xlu0 %v316
    %v318 = vpop.xlane.xlu0 %317
    %v319 = vrcp.pop %v297
    %v320 = vrcp.pop %v300
    %v321 = vrcp.pop %v303
    %v322 = vrcp.pop %v306
    %v323 = vrcp.pop %v309
    %v324 = vrcp.pop %v312
    %v325 = vrcp.pop %v315
    %v326 = vrcp.pop %v318
    %v327 = vmul.f32 %v280, %v319
    %v328 = vmul.f32 %v282, %v320
    %v329 = vmul.f32 %v284, %v321
    %v330 = vmul.f32 %v286, %v322
    %v331 = vmul.f32 %v288, %v323
    %v332 = vmul.f32 %v290, %v324
    %v333 = vmul.f32 %v292, %v325
    %v334 = vmul.f32 %v294, %v326
    %335 = vrot.lane.b32.xlu0 %v137, 64
    %v336 = vpop.permute.xlu0 %335
    %337 = vrot.lane.b32.xlu0 %v144, 64
    %v338 = vpop.permute.xlu0 %337
    %339 = vrot.lane.b32.xlu0 %v146, 64
    %v340 = vpop.permute.xlu0 %339
    %341 = vrot.lane.b32.xlu0 %v148, 64
    %v342 = vpop.permute.xlu0 %341
    %343 = vrot.lane.b32.xlu0 %v140, 64
    %v344 = vpop.permute.xlu0 %343
    %345 = vrot.lane.b32.xlu0 %v151, 64
    %v346 = vpop.permute.xlu0 %345
    %347 = vrot.lane.b32.xlu0 %v153, 64
    %v348 = vpop.permute.xlu0 %347
    %349 = vrot.lane.b32.xlu0 %v155, 64
    %v350 = vpop.permute.xlu0 %349
    %v360 = vsel %vm246, %v327, 0
    %v363 = vsel %vm246, %v328, 0
    %v366 = vsel %vm246, %v329, 0
    %v369 = vsel %vm246, %v330, 0
    %v372 = vsel %vm246, %v331, 0
    %v375 = vsel %vm246, %v332, 0
    %v378 = vsel %vm246, %v333, 0
    %v381 = vsel %vm246, %v334, 0
    %383 = vmatpush.msra.mxu0 0.0
    %384 = vmatpush.msra.mxu0 0.0
    %385 = vmatpush.msra.mxu0 0.0
    %386 = vmatpush.msra.mxu0 0.0
    %387 = vmatpush.msra.mxu0 0.0
    %388 = vmatpush.msra.mxu0 0.0
    %389 = vmatpush.msra.mxu0 0.0
    %390 = vmatpush.msra.mxu0 0.0
    %391 = vmatpush.msra.mxu0 %v350
    %392 = vmatpush.msra.mxu0 %v348
    %393 = vmatpush.msra.mxu0 %v346
    %394 = vmatpush.msra.mxu0 %v344
    %395 = vmatpush.msra.mxu0 %v342
    %396 = vmatpush.msra.mxu0 %v340
    %397 = vmatpush.msra.mxu0 %v338
    %398 = vmatpush.msra.mxu0 %v336
    %399 = vmatmul.f32.gmra.mxu0 %v360
    %v400 = vpop.f32.mrf.mxu0
    %v401 = vadd.f32 0.0, %v400
    %402 = vmatmul.f32.gmra.mxu0 %v363
    %v403 = vpop.f32.mrf.mxu0
    %v404 = vadd.f32 0.0, %v403
    %405 = vmatmul.f32.gmra.mxu0 %v366
    %v406 = vpop.f32.mrf.mxu0
    %v407 = vadd.f32 0.0, %v406
    %408 = vmatmul.f32.gmra.mxu0 %v369
    %v409 = vpop.f32.mrf.mxu0
    %v410 = vadd.f32 0.0, %v409
    %411 = vmatmul.f32.gmra.mxu0 %v372
    %v412 = vpop.f32.mrf.mxu0
    %v413 = vadd.f32 0.0, %v412
    %414 = vmatmul.f32.gmra.mxu0 %v375
    %v415 = vpop.f32.mrf.mxu0
    %v416 = vadd.f32 0.0, %v415
    %417 = vmatmul.f32.gmra.mxu0 %v378
    %v418 = vpop.f32.mrf.mxu0
    %v419 = vadd.f32 0.0, %v418
    %420 = vmatmul.f32.gmra.mxu0 %v381
    %v421 = vpop.f32.mrf.mxu0
    %v422 = vadd.f32 0.0, %v421
    %423 = vdwg.mxu0
    %425 = vrot.lane.b32.xlu0 %v404, 8
    %v426 = vpop.permute.xlu0 %425
    %429 = vrot.lane.b32.xlu0 %v407, 16
    %v430 = vpop.permute.xlu0 %429
    %433 = vrot.lane.b32.xlu0 %v410, 24
    %v434 = vpop.permute.xlu0 %433
    %v436 = vsel %vm172, %v401, %v426
    %vm437 = vcmask 130048
    %v438 = vsel %vm437, %v436, %v430
    %vm439 = vcmask 195584
    %v440 = vsel %vm439, %v438, %v434
    %442 = vrot.lane.b32.xlu0 %v416, 8
    %v443 = vpop.permute.xlu0 %442
    %446 = vrot.lane.b32.xlu0 %v419, 16
    %v447 = vpop.permute.xlu0 %446
    %450 = vrot.lane.b32.xlu0 %v422, 24
    %v451 = vpop.permute.xlu0 %450
    %v453 = vsel %vm172, %v413, %v443
    %v454 = vsel %vm437, %v453, %v447
    %v455 = vsel %vm439, %v454, %v451
    %v457 = vsel %vm70, %v440, 0
    %v460 = vsel %vm70, %v455, 0
    %462 = vmatpush.msra.mxu0 0.0
    %463 = vmatpush.msra.mxu0 0.0
    %464 = vmatpush.msra.mxu0 0.0
    %465 = vmatpush.msra.mxu0 0.0
    %466 = vmatpush.msra.mxu0 0.0
    %467 = vmatpush.msra.mxu0 0.0
    %468 = vmatpush.msra.mxu0 0.0
    %469 = vmatpush.msra.mxu0 0.0
    %470 = vmatpush.msra.mxu0 0.0
    %471 = vmatpush.msra.mxu0 0.0
    %472 = vmatpush.msra.mxu0 0.0
    %473 = vmatpush.msra.mxu0 0.0
    %474 = vmatpush.msra.mxu0 %v55
    %475 = vmatpush.msra.mxu0 %v54
    %476 = vmatpush.msra.mxu0 %v53
    %477 = vmatpush.msra.mxu0 %v52
    %478 = vmatmul.f32.gmra.mxu0 %v457
    %v479 = vpop.f32.mrf.mxu0
    %v480 = vadd.f32 0.0, %v479
    %481 = vmatmul.f32.gmra.mxu0 %v460
    %v482 = vpop.f32.mrf.mxu0
    %v483 = vadd.f32 0.0, %v482
    %484 = vdwg.mxu0
    %v485 = vadd.f32 %v36, %v480
    %v486 = vadd.f32 %v37, %v483
    %v487 = vmul.f32 %v485, %v485
    %v488 = vmul.f32 %v486, %v486
    %v489 = vsel %vm70, %v487, 0.0
    %490 = vadd.xlane.f32.xlu0 %v489
    %v491 = vpop.xlane.xlu0 %490
    %v492 = vsel %vm70, %v488, 0.0
    %493 = vadd.xlane.f32.xlu0 %v492
    %v494 = vpop.xlane.xlu0 %493
    %v495 = vmul.f32 %v491, %v83
    %v496 = vmul.f32 %v494, %v83
    %v497 = vadd.f32 %v495, 1e-06
    %v498 = vadd.f32 %v496, 1e-06
    %v499 = vrsqrt.pop %v497
    %v500 = vmul.f32 %v499, %v497
    %v501 = vmul.f32 %v500, %v499
    %v502 = vmul.f32 0.5, %v501
    %v503 = vsub.f32 1.5, %v502
    %v504 = vmul.f32 %v499, %v503
    %vm505 = vweird.f32 %v497
    %vm506 = vweird.f32 %v499
    %vm507 = vmor %vm505, %vm506
    %v508 = vsel %vm507, %v499, %v504
    %v509 = vrsqrt.pop %v498
    %v510 = vmul.f32 %v509, %v498
    %v511 = vmul.f32 %v510, %v509
    %v512 = vmul.f32 0.5, %v511
    %v513 = vsub.f32 1.5, %v512
    %v514 = vmul.f32 %v509, %v513
    %vm515 = vweird.f32 %v498
    %vm516 = vweird.f32 %v509
    %vm517 = vmor %vm515, %vm516
    %v518 = vsel %vm517, %v509, %v514
    %v519 = vmul.f32 %v485, %v508
    %v520 = vmul.f32 %v486, %v518
    %v521 = vperm.slane %v47, 0
    %v522 = vmul.f32 %v519, %v521
    %v523 = vmul.f32 %v520, %v521
    %v525 = vsel %vm70, %v522, 0
    %v528 = vsel %vm70, %v523, 0
    %530 = vmatpush.msra.mxu0 0.0
    %531 = vmatpush.msra.mxu0 0.0
    %532 = vmatpush.msra.mxu0 0.0
    %533 = vmatpush.msra.mxu0 0.0
    %534 = vmatpush.msra.mxu0 0.0
    %535 = vmatpush.msra.mxu0 0.0
    %536 = vmatpush.msra.mxu0 0.0
    %537 = vmatpush.msra.mxu0 0.0
    %538 = vmatpush.msra.mxu0 0.0
    %539 = vmatpush.msra.mxu0 0.0
    %540 = vmatpush.msra.mxu0 0.0
    %541 = vmatpush.msra.mxu0 0.0
    %542 = vmatpush.msra.mxu0 %v59
    %543 = vmatpush.msra.mxu0 %v58
    %544 = vmatpush.msra.mxu0 %v57
    %545 = vmatpush.msra.mxu0 %v56
    %546 = vmatmul.f32.gmra.mxu0 %v525
    %v547 = vpop.f32.mrf.mxu0
    %v548 = vadd.f32 0.0, %v547
    %549 = vmatmul.f32.gmra.mxu0 %v528
    %v550 = vpop.f32.mrf.mxu0
    %v551 = vadd.f32 0.0, %v550
    %552 = vdwg.mxu0
    %v553 = vmax.f32 %v548, 0.0
    %v554 = vmax.f32 %v551, 0.0
    %v556 = vsel %vm246, %v553, 0
    %v559 = vsel %vm246, %v554, 0
    %561 = vmatpush.msra.mxu0 0.0
    %562 = vmatpush.msra.mxu0 0.0
    %563 = vmatpush.msra.mxu0 0.0
    %564 = vmatpush.msra.mxu0 0.0
    %565 = vmatpush.msra.mxu0 0.0
    %566 = vmatpush.msra.mxu0 0.0
    %567 = vmatpush.msra.mxu0 0.0
    %568 = vmatpush.msra.mxu0 0.0
    %569 = vmatpush.msra.mxu0 %v67
    %570 = vmatpush.msra.mxu0 %v66
    %571 = vmatpush.msra.mxu0 %v65
    %572 = vmatpush.msra.mxu0 %v64
    %573 = vmatpush.msra.mxu0 %v63
    %574 = vmatpush.msra.mxu0 %v62
    %575 = vmatpush.msra.mxu0 %v61
    %576 = vmatpush.msra.mxu0 %v60
    %577 = vmatmul.f32.gmra.mxu0 %v556
    %v578 = vpop.f32.mrf.mxu0
    %v579 = vadd.f32 0.0, %v578
    %580 = vmatmul.f32.gmra.mxu0 %v559
    %v581 = vpop.f32.mrf.mxu0
    %v582 = vadd.f32 0.0, %v581
    %583 = vdwg.mxu0
    %v584 = vadd.f32 %v485, %v579
    %v585 = vadd.f32 %v486, %v582
    %v586 = vld [vmem:[%s3 + $0x1] sm:$0x1]
    %v587 = vld [vmem:[%s3 + $0x3] sm:$0x1]
    %s588 = scalar_lea.vmem [#allocation2], 160
    %v589 = vld [vmem:[%s588] sm:$0xff]
    %v590 = vld [vmem:[%s588 + $0x8] sm:$0xff]
    %v591 = vld [vmem:[%s588 + $0x10] sm:$0xff]
    %v592 = vld [vmem:[%s588 + $0x18] sm:$0xff]
    %v593 = vld [vmem:[%s588 + $0x20] sm:$0xff]
    %v594 = vld [vmem:[%s588 + $0x28] sm:$0xff]
    %v595 = vld [vmem:[%s588 + $0x30] sm:$0xff]
    %v596 = vld [vmem:[%s588 + $0x38] sm:$0xff]
    %v597 = vld [vmem:[%s588 + $0x40] sm:$0xff]
    %v598 = vld [vmem:[%s588 + $0x48] sm:$0xff]
    %v599 = vld [vmem:[%s588 + $0x50] sm:$0xff]
    %v600 = vld [vmem:[%s588 + $0x58] sm:$0xff]
    %v601 = vld [vmem:[%s588 + $0x60] sm:$0xff]
    %v602 = vld [vmem:[%s588 + $0x68] sm:$0xff]
    %v603 = vld [vmem:[%s588 + $0x70] sm:$0xff]
    %v604 = vld [vmem:[%s588 + $0x78] sm:$0xff]
    %v605 = vld [vmem:[%s588 + $0x80] sm:$0xff]
    %v606 = vld [vmem:[%s588 + $0x88] sm:$0xff]
    %v607 = vld [vmem:[%s588 + $0x90] sm:$0xff]
    %v608 = vld [vmem:[%s588 + $0x98] sm:$0xff]
    %v609 = vmul.f32 %v584, %v584
    %v610 = vmul.f32 %v585, %v585
    %v611 = vsel %vm70, %v609, 0.0
    %612 = vadd.xlane.f32.xlu0 %v611
    %v613 = vpop.xlane.xlu0 %612
    %v614 = vsel %vm70, %v610, 0.0
    %615 = vadd.xlane.f32.xlu0 %v614
    %v616 = vpop.xlane.xlu0 %615
    %v617 = vmul.f32 %v613, %v83
    %v618 = vmul.f32 %v616, %v83
    %v619 = vadd.f32 %v617, 1e-06
    %v620 = vadd.f32 %v618, 1e-06
    %v621 = vrsqrt.pop %v619
    %v622 = vmul.f32 %v621, %v619
    %v623 = vmul.f32 %v622, %v621
    %v624 = vmul.f32 0.5, %v623
    %v625 = vsub.f32 1.5, %v624
    %v626 = vmul.f32 %v621, %v625
    %vm627 = vweird.f32 %v619
    %vm628 = vweird.f32 %v621
    %vm629 = vmor %vm627, %vm628
    %v630 = vsel %vm629, %v621, %v626
    %v631 = vrsqrt.pop %v620
    %v632 = vmul.f32 %v631, %v620
    %v633 = vmul.f32 %v632, %v631
    %v634 = vmul.f32 0.5, %v633
    %v635 = vsub.f32 1.5, %v634
    %v636 = vmul.f32 %v631, %v635
    %vm637 = vweird.f32 %v620
    %vm638 = vweird.f32 %v631
    %vm639 = vmor %vm637, %vm638
    %v640 = vsel %vm639, %v631, %v636
    %v641 = vmul.f32 %v584, %v630
    %v642 = vmul.f32 %v585, %v640
    %v643 = vperm.slane %v586, 0
    %v644 = vmul.f32 %v641, %v643
    %v645 = vmul.f32 %v642, %v643
    %v647 = vsel %vm70, %v644, 0
    %v650 = vsel %vm70, %v645, 0
    %652 = vmatpush.msra.mxu0 0.0
    %653 = vmatpush.msra.mxu0 0.0
    %654 = vmatpush.msra.mxu0 0.0
    %655 = vmatpush.msra.mxu0 0.0
    %656 = vmatpush.msra.mxu0 0.0
    %657 = vmatpush.msra.mxu0 0.0
    %658 = vmatpush.msra.mxu0 0.0
    %659 = vmatpush.msra.mxu0 0.0
    %660 = vmatpush.msra.mxu0 0.0
    %661 = vmatpush.msra.mxu0 0.0
    %662 = vmatpush.msra.mxu0 0.0
    %663 = vmatpush.msra.mxu0 0.0
    %664 = vmatpush.msra.mxu0 %v592
    %665 = vmatpush.msra.mxu0 %v591
    %666 = vmatpush.msra.mxu0 %v590
    %667 = vmatpush.msra.mxu0 %v589
    %668 = vmatmul.f32.gmra.mxu0 %v647
    %v669 = vpop.f32.mrf.mxu0
    %v670 = vadd.f32 0.0, %v669
    %671 = vmatmul.f32.gmra.mxu0 %v650
    %v672 = vpop.f32.mrf.mxu0
    %v673 = vadd.f32 0.0, %v672
    %674 = vdwg.mxu0
    %676 = vrot.lane.b32.xlu0 %v670, 120
    %v677 = vpop.permute.xlu0 %676
    %678 = vrot.lane.b32.xlu0 %v670, 112
    %v679 = vpop.permute.xlu0 %678
    %680 = vrot.lane.b32.xlu0 %v670, 104
    %v681 = vpop.permute.xlu0 %680
    %683 = vrot.lane.b32.xlu0 %v673, 120
    %v684 = vpop.permute.xlu0 %683
    %685 = vrot.lane.b32.xlu0 %v673, 112
    %v686 = vpop.permute.xlu0 %685
    %687 = vrot.lane.b32.xlu0 %v673, 104
    %v688 = vpop.permute.xlu0 %687
    %689 = vrot.lane.b32.xlu0 %v670, 96
    %v690 = vpop.permute.xlu0 %689
    %691 = vrot.lane.b32.xlu0 %v677, 96
    %v692 = vpop.permute.xlu0 %691
    %693 = vrot.lane.b32.xlu0 %v679, 96
    %v694 = vpop.permute.xlu0 %693
    %695 = vrot.lane.b32.xlu0 %v681, 96
    %v696 = vpop.permute.xlu0 %695
    %697 = vrot.lane.b32.xlu0 %v673, 96
    %v698 = vpop.permute.xlu0 %697
    %699 = vrot.lane.b32.xlu0 %v684, 96
    %v700 = vpop.permute.xlu0 %699
    %701 = vrot.lane.b32.xlu0 %v686, 96
    %v702 = vpop.permute.xlu0 %701
    %703 = vrot.lane.b32.xlu0 %v688, 96
    %v704 = vpop.permute.xlu0 %703
    %v705 = vsel %vm172, %v670, 0
    %v707 = vsel %vm172, %v677, 0
    %v709 = vsel %vm172, %v679, 0
    %v711 = vsel %vm172, %v681, 0
    %v713 = vsel %vm172, %v673, 0
    %v715 = vsel %vm172, %v684, 0
    %v717 = vsel %vm172, %v686, 0
    %v719 = vsel %vm172, %v688, 0
    %v721 = vsel %vm172, %v690, 0
    %v723 = vsel %vm172, %v692, 0
    %v725 = vsel %vm172, %v694, 0
    %v727 = vsel %vm172, %v696, 0
    %v729 = vsel %vm172, %v698, 0
    %v731 = vsel %vm172, %v700, 0
    %v733 = vsel %vm172, %v702, 0
    %v735 = vsel %vm172, %v704, 0
    %737 = vmatpush.xpose.msra.mxu0 0.0
    %738 = vmatpush.xpose.msra.mxu0 0.0
    %739 = vmatpush.xpose.msra.mxu0 0.0
    %740 = vmatpush.xpose.msra.mxu0 0.0
    %741 = vmatpush.xpose.msra.mxu0 0.0
    %742 = vmatpush.xpose.msra.mxu0 0.0
    %743 = vmatpush.xpose.msra.mxu0 0.0
    %744 = vmatpush.xpose.msra.mxu0 0.0
    %745 = vmatpush.xpose.msra.mxu0 %v735
    %746 = vmatpush.xpose.msra.mxu0 %v733
    %747 = vmatpush.xpose.msra.mxu0 %v731
    %748 = vmatpush.xpose.msra.mxu0 %v729
    %749 = vmatpush.xpose.msra.mxu0 %v727
    %750 = vmatpush.xpose.msra.mxu0 %v725
    %751 = vmatpush.xpose.msra.mxu0 %v723
    %752 = vmatpush.xpose.msra.mxu0 %v721
    %753 = vmatmul.f32.gmra.mxu0 %v705
    %v754 = vpop.f32.mrf.mxu0
    %v755 = vadd.f32 %v38, %v754
    %756 = vmatmul.f32.gmra.mxu0 %v707
    %v757 = vpop.f32.mrf.mxu0
    %v758 = vadd.f32 %v39, %v757
    %759 = vmatmul.f32.gmra.mxu0 %v709
    %v760 = vpop.f32.mrf.mxu0
    %v761 = vadd.f32 %v40, %v760
    %762 = vmatmul.f32.gmra.mxu0 %v711
    %v763 = vpop.f32.mrf.mxu0
    %v764 = vadd.f32 %v41, %v763
    %765 = vmatmul.f32.gmra.mxu0 %v713
    %v766 = vpop.f32.mrf.mxu0
    %v767 = vadd.f32 %v42, %v766
    %768 = vmatmul.f32.gmra.mxu0 %v715
    %v769 = vpop.f32.mrf.mxu0
    %v770 = vadd.f32 %v43, %v769
    %771 = vmatmul.f32.gmra.mxu0 %v717
    %v772 = vpop.f32.mrf.mxu0
    %v773 = vadd.f32 %v44, %v772
    %774 = vmatmul.f32.gmra.mxu0 %v719
    %v775 = vpop.f32.mrf.mxu0
    %v776 = vadd.f32 %v45, %v775
    %777 = vdwg.mxu0
    %v778 = vsel %vm246, %v755, -inf
    %779 = vmax.xlane.f32.xlu0 %v778
    %v780 = vpop.xlane.xlu0 %779
    %v781 = vsel %vm246, %v758, -inf
    %782 = vmax.xlane.f32.xlu0 %v781
    %v783 = vpop.xlane.xlu0 %782
    %v784 = vsel %vm246, %v761, -inf
    %785 = vmax.xlane.f32.xlu0 %v784
    %v786 = vpop.xlane.xlu0 %785
    %v787 = vsel %vm246, %v764, -inf
    %788 = vmax.xlane.f32.xlu0 %v787
    %v789 = vpop.xlane.xlu0 %788
    %v790 = vsel %vm246, %v767, -inf
    %791 = vmax.xlane.f32.xlu0 %v790
    %v792 = vpop.xlane.xlu0 %791
    %v793 = vsel %vm246, %v770, -inf
    %794 = vmax.xlane.f32.xlu0 %v793
    %v795 = vpop.xlane.xlu0 %794
    %v796 = vsel %vm246, %v773, -inf
    %797 = vmax.xlane.f32.xlu0 %v796
    %v798 = vpop.xlane.xlu0 %797
    %v799 = vsel %vm246, %v776, -inf
    %800 = vmax.xlane.f32.xlu0 %v799
    %v801 = vpop.xlane.xlu0 %800
    %v802 = vsub.f32 %v755, %v780
    %v803 = vsub.f32 %v758, %v783
    %v804 = vsub.f32 %v761, %v786
    %v805 = vsub.f32 %v764, %v789
    %v806 = vsub.f32 %v767, %v792
    %v807 = vsub.f32 %v770, %v795
    %v808 = vsub.f32 %v773, %v798
    %v809 = vsub.f32 %v776, %v801
    %v810 = vmul.f32 %v802, 1.442695
    %v811 = vpow.pop %v810
    %v812 = vmul.f32 %v803, 1.442695
    %v813 = vpow.pop %v812
    %v814 = vmul.f32 %v804, 1.442695
    %v815 = vpow.pop %v814
    %v816 = vmul.f32 %v805, 1.442695
    %v817 = vpow.pop %v816
    %v818 = vmul.f32 %v806, 1.442695
    %v819 = vpow.pop %v818
    %v820 = vmul.f32 %v807, 1.442695
    %v821 = vpow.pop %v820
    %v822 = vmul.f32 %v808, 1.442695
    %v823 = vpow.pop %v822
    %v824 = vmul.f32 %v809, 1.442695
    %v825 = vpow.pop %v824
    %v826 = vsel %vm246, %v811, 0.0
    %827 = vadd.xlane.f32.xlu0 %v826
    %v828 = vpop.xlane.xlu0 %827
    %v829 = vsel %vm246, %v813, 0.0
    %830 = vadd.xlane.f32.xlu0 %v829
    %v831 = vpop.xlane.xlu0 %830
    %v832 = vsel %vm246, %v815, 0.0
    %833 = vadd.xlane.f32.xlu0 %v832
    %v834 = vpop.xlane.xlu0 %833
    %v835 = vsel %vm246, %v817, 0.0
    %836 = vadd.xlane.f32.xlu0 %v835
    %v837 = vpop.xlane.xlu0 %836
    %v838 = vsel %vm246, %v819, 0.0
    %839 = vadd.xlane.f32.xlu0 %v838
    %v840 = vpop.xlane.xlu0 %839
    %v841 = vsel %vm246, %v821, 0.0
    %842 = vadd.xlane.f32.xlu0 %v841
    %v843 = vpop.xlane.xlu0 %842
    %v844 = vsel %vm246, %v823, 0.0
    %845 = vadd.xlane.f32.xlu0 %v844
    %v846 = vpop.xlane.xlu0 %845
    %v847 = vsel %vm246, %v825, 0.0
    %848 = vadd.xlane.f32.xlu0 %v847
    %v849 = vpop.xlane.xlu0 %848
    %v850 = vrcp.pop %v828
    %v851 = vrcp.pop %v831
    %v852 = vrcp.pop %v834
    %v853 = vrcp.pop %v837
    %v854 = vrcp.pop %v840
    %v855 = vrcp.pop %v843
    %v856 = vrcp.pop %v846
    %v857 = vrcp.pop %v849
    %v858 = vmul.f32 %v811, %v850
    %v859 = vmul.f32 %v813, %v851
    %v860 = vmul.f32 %v815, %v852
    %v861 = vmul.f32 %v817, %v853
    %v862 = vmul.f32 %v819, %v854
    %v863 = vmul.f32 %v821, %v855
    %v864 = vmul.f32 %v823, %v856
    %v865 = vmul.f32 %v825, %v857
    %866 = vrot.lane.b32.xlu0 %v670, 64
    %v867 = vpop.permute.xlu0 %866
    %868 = vrot.lane.b32.xlu0 %v677, 64
    %v869 = vpop.permute.xlu0 %868
    %870 = vrot.lane.b32.xlu0 %v679, 64
    %v871 = vpop.permute.xlu0 %870
    %872 = vrot.lane.b32.xlu0 %v681, 64
    %v873 = vpop.permute.xlu0 %872
    %874 = vrot.lane.b32.xlu0 %v673, 64
    %v875 = vpop.permute.xlu0 %874
    %876 = vrot.lane.b32.xlu0 %v684, 64
    %v877 = vpop.permute.xlu0 %876
    %878 = vrot.lane.b32.xlu0 %v686, 64
    %v879 = vpop.permute.xlu0 %878
    %880 = vrot.lane.b32.xlu0 %v688, 64
    %v881 = vpop.permute.xlu0 %880
    %v891 = vsel %vm246, %v858, 0
    %v894 = vsel %vm246, %v859, 0
    %v897 = vsel %vm246, %v860, 0
    %v900 = vsel %vm246, %v861, 0
    %v903 = vsel %vm246, %v862, 0
    %v906 = vsel %vm246, %v863, 0
    %v909 = vsel %vm246, %v864, 0
    %v912 = vsel %vm246, %v865, 0
    %914 = vmatpush.msra.mxu0 0.0
    %915 = vmatpush.msra.mxu0 0.0
    %916 = vmatpush.msra.mxu0 0.0
    %917 = vmatpush.msra.mxu0 0.0
    %918 = vmatpush.msra.mxu0 0.0
    %919 = vmatpush.msra.mxu0 0.0
    %920 = vmatpush.msra.mxu0 0.0
    %921 = vmatpush.msra.mxu0 0.0
    %922 = vmatpush.msra.mxu0 %v881
    %923 = vmatpush.msra.mxu0 %v879
    %924 = vmatpush.msra.mxu0 %v877
    %925 = vmatpush.msra.mxu0 %v875
    %926 = vmatpush.msra.mxu0 %v873
    %927 = vmatpush.msra.mxu0 %v871
    %928 = vmatpush.msra.mxu0 %v869
    %929 = vmatpush.msra.mxu0 %v867
    %930 = vmatmul.f32.gmra.mxu0 %v891
    %v931 = vpop.f32.mrf.mxu0
    %v932 = vadd.f32 0.0, %v931
    %933 = vmatmul.f32.gmra.mxu0 %v894
    %v934 = vpop.f32.mrf.mxu0
    %v935 = vadd.f32 0.0, %v934
    %936 = vmatmul.f32.gmra.mxu0 %v897
    %v937 = vpop.f32.mrf.mxu0
    %v938 = vadd.f32 0.0, %v937
    %939 = vmatmul.f32.gmra.mxu0 %v900
    %v940 = vpop.f32.mrf.mxu0
    %v941 = vadd.f32 0.0, %v940
    %942 = vmatmul.f32.gmra.mxu0 %v903
    %v943 = vpop.f32.mrf.mxu0
    %v944 = vadd.f32 0.0, %v943
    %945 = vmatmul.f32.gmra.mxu0 %v906
    %v946 = vpop.f32.mrf.mxu0
    %v947 = vadd.f32 0.0, %v946
    %948 = vmatmul.f32.gmra.mxu0 %v909
    %v949 = vpop.f32.mrf.mxu0
    %v950 = vadd.f32 0.0, %v949
    %951 = vmatmul.f32.gmra.mxu0 %v912
    %v952 = vpop.f32.mrf.mxu0
    %v953 = vadd.f32 0.0, %v952
    %954 = vdwg.mxu0
    %956 = vrot.lane.b32.xlu0 %v935, 8
    %v957 = vpop.permute.xlu0 %956
    %960 = vrot.lane.b32.xlu0 %v938, 16
    %v961 = vpop.permute.xlu0 %960
    %964 = vrot.lane.b32.xlu0 %v941, 24
    %v965 = vpop.permute.xlu0 %964
    %v967 = vsel %vm172, %v932, %v957
    %v968 = vsel %vm437, %v967, %v961
    %v969 = vsel %vm439, %v968, %v965
    %971 = vrot.lane.b32.xlu0 %v947, 8
    %v972 = vpop.permute.xlu0 %971
    %975 = vrot.lane.b32.xlu0 %v950, 16
    %v976 = vpop.permute.xlu0 %975
    %979 = vrot.lane.b32.xlu0 %v953, 24
    %v980 = vpop.permute.xlu0 %979
    %v982 = vsel %vm172, %v944, %v972
    %v983 = vsel %vm437, %v982, %v976
    %v984 = vsel %vm439, %v983, %v980
    %v986 = vsel %vm70, %v969, 0
    %v989 = vsel %vm70, %v984, 0
    %991 = vmatpush.msra.mxu0 0.0
    %992 = vmatpush.msra.mxu0 0.0
    %993 = vmatpush.msra.mxu0 0.0
    %994 = vmatpush.msra.mxu0 0.0
    %995 = vmatpush.msra.mxu0 0.0
    %996 = vmatpush.msra.mxu0 0.0
    %997 = vmatpush.msra.mxu0 0.0
    %998 = vmatpush.msra.mxu0 0.0
    %999 = vmatpush.msra.mxu0 0.0
    %1000 = vmatpush.msra.mxu0 0.0
    %1001 = vmatpush.msra.mxu0 0.0
    %1002 = vmatpush.msra.mxu0 0.0
    %1003 = vmatpush.msra.mxu0 %v596
    %1004 = vmatpush.msra.mxu0 %v595
    %1005 = vmatpush.msra.mxu0 %v594
    %1006 = vmatpush.msra.mxu0 %v593
    %1007 = vmatmul.f32.gmra.mxu0 %v986
    %v1008 = vpop.f32.mrf.mxu0
    %v1009 = vadd.f32 0.0, %v1008
    %1010 = vmatmul.f32.gmra.mxu0 %v989
    %v1011 = vpop.f32.mrf.mxu0
    %v1012 = vadd.f32 0.0, %v1011
    %1013 = vdwg.mxu0
    %v1014 = vadd.f32 %v584, %v1009
    %v1015 = vadd.f32 %v585, %v1012
    %v1016 = vmul.f32 %v1014, %v1014
    %v1017 = vmul.f32 %v1015, %v1015
    %v1018 = vsel %vm70, %v1016, 0.0
    %1019 = vadd.xlane.f32.xlu0 %v1018
    %v1020 = vpop.xlane.xlu0 %1019
    %v1021 = vsel %vm70, %v1017, 0.0
    %1022 = vadd.xlane.f32.xlu0 %v1021
    %v1023 = vpop.xlane.xlu0 %1022
    %v1024 = vmul.f32 %v1020, %v83
    %v1025 = vmul.f32 %v1023, %v83
    %v1026 = vadd.f32 %v1024, 1e-06
    %v1027 = vadd.f32 %v1025, 1e-06
    %v1028 = vrsqrt.pop %v1026
    %v1029 = vmul.f32 %v1028, %v1026
    %v1030 = vmul.f32 %v1029, %v1028
    %v1031 = vmul.f32 0.5, %v1030
    %v1032 = vsub.f32 1.5, %v1031
    %v1033 = vmul.f32 %v1028, %v1032
    %vm1034 = vweird.f32 %v1026
    %vm1035 = vweird.f32 %v1028
    %vm1036 = vmor %vm1034, %vm1035
    %v1037 = vsel %vm1036, %v1028, %v1033
    %v1038 = vrsqrt.pop %v1027
    %v1039 = vmul.f32 %v1038, %v1027
    %v1040 = vmul.f32 %v1039, %v1038
    %v1041 = vmul.f32 0.5, %v1040
    %v1042 = vsub.f32 1.5, %v1041
    %v1043 = vmul.f32 %v1038, %v1042
    %vm1044 = vweird.f32 %v1027
    %vm1045 = vweird.f32 %v1038
    %vm1046 = vmor %vm1044, %vm1045
    %v1047 = vsel %vm1046, %v1038, %v1043
    %v1048 = vmul.f32 %v1014, %v1037
    %v1049 = vmul.f32 %v1015, %v1047
    %v1050 = vperm.slane %v587, 0
    %v1051 = vmul.f32 %v1048, %v1050
    %v1052 = vmul.f32 %v1049, %v1050
    %v1054 = vsel %vm70, %v1051, 0
    %v1057 = vsel %vm70, %v1052, 0
    %1059 = vmatpush.msra.mxu0 0.0
    %1060 = vmatpush.msra.mxu0 0.0
    %1061 = vmatpush.msra.mxu0 0.0
    %1062 = vmatpush.msra.mxu0 0.0
    %1063 = vmatpush.msra.mxu0 0.0
    %1064 = vmatpush.msra.mxu0 0.0
    %1065 = vmatpush.msra.mxu0 0.0
    %1066 = vmatpush.msra.mxu0 0.0
    %1067 = vmatpush.msra.mxu0 0.0
    %1068 = vmatpush.msra.mxu0 0.0
    %1069 = vmatpush.msra.mxu0 0.0
    %1070 = vmatpush.msra.mxu0 0.0
    %1071 = vmatpush.msra.mxu0 %v600
    %1072 = vmatpush.msra.mxu0 %v599
    %1073 = vmatpush.msra.mxu0 %v598
    %1074 = vmatpush.msra.mxu0 %v597
    %1075 = vmatmul.f32.gmra.mxu0 %v1054
    %v1076 = vpop.f32.mrf.mxu0
    %v1077 = vadd.f32 0.0, %v1076
    %1078 = vmatmul.f32.gmra.mxu0 %v1057
    %v1079 = vpop.f32.mrf.mxu0
    %v1080 = vadd.f32 0.0, %v1079
    %1081 = vdwg.mxu0
    %v1082 = vmax.f32 %v1077, 0.0
    %v1083 = vmax.f32 %v1080, 0.0
    %v1085 = vsel %vm246, %v1082, 0
    %v1088 = vsel %vm246, %v1083, 0
    %1090 = vmatpush.msra.mxu0 0.0
    %1091 = vmatpush.msra.mxu0 0.0
    %1092 = vmatpush.msra.mxu0 0.0
    %1093 = vmatpush.msra.mxu0 0.0
    %1094 = vmatpush.msra.mxu0 0.0
    %1095 = vmatpush.msra.mxu0 0.0
    %1096 = vmatpush.msra.mxu0 0.0
    %1097 = vmatpush.msra.mxu0 0.0
    %1098 = vmatpush.msra.mxu0 %v608
    %1099 = vmatpush.msra.mxu0 %v607
    %1100 = vmatpush.msra.mxu0 %v606
    %1101 = vmatpush.msra.mxu0 %v605
    %1102 = vmatpush.msra.mxu0 %v604
    %1103 = vmatpush.msra.mxu0 %v603
    %1104 = vmatpush.msra.mxu0 %v602
    %1105 = vmatpush.msra.mxu0 %v601
    %1106 = vmatmul.f32.gmra.mxu0 %v1085
    %v1107 = vpop.f32.mrf.mxu0
    %v1108 = vadd.f32 0.0, %v1107
    %1109 = vmatmul.f32.gmra.mxu0 %v1088
    %v1110 = vpop.f32.mrf.mxu0
    %v1111 = vadd.f32 0.0, %v1110
    %1112 = vdwg.mxu0
    %v1113 = vadd.f32 %v1014, %v1108
    %v1114 = vadd.f32 %v1015, %v1111
    %v1116 = vrot.slane %v1113, 7
    %v1119 = vrot.slane %v1114, 6
    %vm1121 = vcmask 1040384
    %v1122 = vsel %vm1121, %v1116, %v1119
    %v1123 = vld [vmem:[%s3 + $0x4] sm:$0x1]
    %v1124 = vmul.f32 %v1122, %v1122
    %vm1125 = vcmask 254976
    %v1126 = vsel %vm1125, %v1124, 0.0
    %1127 = vadd.xlane.f32.xlu0 %v1126
    %v1128 = vpop.xlane.xlu0 %1127
    %v1129 = vmul.f32 %v1128, %v83
    %v1130 = vadd.f32 %v1129, 1e-06
    %v1131 = vrsqrt.pop %v1130
    %v1132 = vmul.f32 %v1131, %v1130
    %v1133 = vmul.f32 %v1132, %v1131
    %v1134 = vmul.f32 0.5, %v1133
    %v1135 = vsub.f32 1.5, %v1134
    %v1136 = vmul.f32 %v1131, %v1135
    %vm1137 = vweird.f32 %v1130
    %vm1138 = vweird.f32 %v1131
    %vm1139 = vmor %vm1137, %vm1138
    %v1140 = vsel %vm1139, %v1131, %v1136
    %v1141 = vmul.f32 %v1122, %v1140
    %v1142 = vperm.slane %v1123, 0
    %v1143 = vmul.f32 %v1141, %v1142
    %v1144 = vld [vmem:[%s4] sm:$0xff]
    %v1145 = vld [vmem:[%s4 + $0x8] sm:$0xff]
    %v1146 = vld [vmem:[%s4 + $0x10] sm:$0xff]
    %v1147 = vld [vmem:[%s4 + $0x18] sm:$0xff]
    %v1148 = vld [vmem:[%s4 + $0x20] sm:$0xff]
    %v1149 = vld [vmem:[%s4 + $0x28] sm:$0xff]
    %v1150 = vld [vmem:[%s4 + $0x30] sm:$0xff]
    %v1151 = vld [vmem:[%s4 + $0x38] sm:$0xff]
    %s1152 = scalar_lea.vmem %s4, 64
    %v1153 = vld [vmem:[%s1152] ss:$8 sm:$0x3]
    %v1155 = vperm.slane %v1153, 0
    %v1156 = vperm.slane %v1153, 1
    %v1160 = vsel %vm70, %v1143, 0
    %1162 = vmatpush.msra.mxu0 0.0
    %1163 = vmatpush.msra.mxu0 0.0
    %1164 = vmatpush.msra.mxu0 0.0
    %1165 = vmatpush.msra.mxu0 0.0
    %1166 = vmatpush.msra.mxu0 0.0
    %1167 = vmatpush.msra.mxu0 0.0
    %1168 = vmatpush.msra.mxu0 0.0
    %1169 = vmatpush.msra.mxu0 0.0
    %1170 = vmatpush.msra.mxu0 0.0
    %1171 = vmatpush.msra.mxu0 0.0
    %1172 = vmatpush.msra.mxu0 0.0
    %1173 = vmatpush.msra.mxu0 0.0
    %1174 = vmatpush.msra.mxu0 %v1150
    %1175 = vmatpush.msra.mxu0 %v1148
    %1176 = vmatpush.msra.mxu0 %v1146
    %1177 = vmatpush.msra.mxu0 %v1144
    %1178 = vmatmul.f32.gmra.mxu0 %v1160
    %v1179 = vpop.f32.mrf.mxu0
    %v1180 = vadd.f32 %v1155, %v1179
    %1181 = vdwg.mxu0
    %1182 = vmatpush.msra.mxu0 0.0
    %1183 = vmatpush.msra.mxu0 0.0
    %1184 = vmatpush.msra.mxu0 0.0
    %1185 = vmatpush.msra.mxu0 0.0
    %1186 = vmatpush.msra.mxu0 0.0
    %1187 = vmatpush.msra.mxu0 0.0
    %1188 = vmatpush.msra.mxu0 0.0
    %1189 = vmatpush.msra.mxu0 0.0
    %1190 = vmatpush.msra.mxu0 0.0
    %1191 = vmatpush.msra.mxu0 0.0
    %1192 = vmatpush.msra.mxu0 0.0
    %1193 = vmatpush.msra.mxu0 0.0
    %1194 = vmatpush.msra.mxu0 %v1151
    %1195 = vmatpush.msra.mxu0 %v1149
    %1196 = vmatpush.msra.mxu0 %v1147
    %1197 = vmatpush.msra.mxu0 %v1145
    %1198 = vmatmul.f32.gmra.mxu0 %v1160
    %v1199 = vpop.f32.mrf.mxu0
    %v1200 = vadd.f32 %v1156, %v1199
    %1201 = vdwg.mxu0
    %v1204 = vrot.slane %v1200, 6
    %vm1205 = vcmask 1041408
    %v1206 = vsel %vm1205, %v1180, %v1204
    %1208 = vst [vmem:[%s5] sm:$0xf] %v1206
    // Predicated region
    $region26: #{music_t5_forward.1} parent=1 // pred_check
      _
    $region27: #{music_t5_forward.1} parent=1 // pred_check_branch
      %1210 = sbr.rel (0) target = $region29
    $region28: #{music_t5_forward.1} parent=1 // pred_region
      _
    $region29: #{music_t5_forward.1} parent=1 // pred_fallthru
      _
    // Predicated region
    $region30: #{music_t5_forward.1} parent=1 // pred_check
      _
    $region31: #{music_t5_forward.1} parent=1 // pred_check_branch
      %1212 = sbr.rel (0) target = $region33
    $region32: #{music_t5_forward.1} parent=1 // pred_region
      _
    $region33: #{music_t5_forward.1} parent=1 // pred_fallthru
      _
    %1213 = vsyncpa [#allocation3], 1

</llo_original>
